<compile_context>
chip_gen: v5e
topology: v5e:2x2
jax: 0.10.0
libtpu: 0.0.40
codegen_flags: <defaults>
</compile_context>

<pallas_src>
import numpy as np
import jax
import jax.numpy as jnp
from jax import lax
from jax.experimental import pallas as pl
from jax.experimental.pallas import tpu as pltpu

_MEAN = np.array([0.485, 0.456, 0.406], dtype=np.float32)
_STD = np.array([0.229, 0.224, 0.225], dtype=np.float32)


def _bilinear_matrix(out_size: int, in_size: int) -> np.ndarray:
    """(out_size, in_size) matrix reproducing torch.nn.functional.interpolate
    mode='bilinear', align_corners=False along one axis."""
    if out_size == in_size:
        return np.eye(out_size, dtype=np.float32)
    w = np.zeros((out_size, in_size), dtype=np.float32)
    scale = in_size / out_size
    for o in range(out_size):
        src = (o + 0.5) * scale - 0.5
        if src < 0.0:
            src = 0.0
        lo = int(np.floor(src))
        lo = min(lo, in_size - 1)
        hi = lo + 1 if lo < in_size - 1 else lo
        frac = src - lo
        w[o, lo] += 1.0 - frac
        w[o, hi] += frac
    return w


def _resize_geometry(h, w, size):
    # Mirrors the Python-level branch in the torch module exactly.
    if h >= w:
        new_h, new_w = size, int((size / h) * w)
        top_pad, left_pad = 0, (size - new_w) // 2
    else:
        new_h, new_w = int(h * (size / w)), size
        top_pad, left_pad = (size - new_h) // 2, 0
    return new_h, new_w, top_pad, left_pad


def _round_up(x, m):
    return -(-x // m) * m


def _choose_row_tile(size, batch, two_cores):
    """Output-row tile.  v7x (two TensorCores): keep tiles <=256 and guarantee
    >=2 grid steps at B==1; v5e/v6e: keep tiles big (fewer ~0.35us steps).
    Prefers tile counts whose padding overhead is small."""
    max_tr = 256 if two_cores else 512
    need_split = two_cores and batch == 1 and size > 64
    if size <= max_tr and not need_split:
        return _round_up(size, 8)
    n0 = max(2, -(-size // max_tr))
    pad_budget = max(8, size // 16)
    best_tr, best_pad = None, None
    for n in range(n0, n0 + 8):
        tr = _round_up(-(-size // n), 8)
        pad = n * tr - size
        if pad <= pad_budget:
            return tr
        if best_pad is None or pad < best_pad:
            best_tr, best_pad = tr, pad
    return best_tr


def _vmem_usage(c, w, k_rows, tr, s_lanes, in_bpe, out_bpe):
    """Rough VMEM footprint of one grid step (double-buffered blocks +
    accumulator scratch + in-kernel temporaries)."""
    use = 2 * c * k_rows * w * in_bpe        # image chunk (double-buffered)
    use += 2 * tr * k_rows * 2               # Wh block (bf16)
    use += 2 * w * s_lanes * 2               # Ww^T (counted as 2 bufs for safety)
    use += 2 * c * tr * s_lanes * out_bpe    # output block
    use += c * tr * w * 4                    # f32 accumulator scratch
    # temporaries: bf16 chunk cast, f32 dot result, bf16 tmp, f32 plane
    use += k_rows * w * 2 + tr * w * 4 + c * tr * w * 2 + c * tr * s_lanes * 4
    return use


def _choose_k_rows(h, w, c, tr, s_lanes, in_bpe, out_bpe, budget, max_k_rows):
    """Input-row (K) chunk.  Full height when it fits the VMEM budget,
    otherwise the largest multiple of 128 that does (lane constraint of the
    Wh block).  max_k_rows is a tuning/test override."""
    if max_k_rows is None:
        if h <= 128 or _vmem_usage(c, w, h, tr, s_lanes, in_bpe, out_bpe) <= budget:
            return h, 1
        hk = (h // 128) * 128
    else:
        hk = max(128, (min(max_k_rows, h) // 128) * 128)
        if hk >= h:
            return h, 1
    while hk > 128 and _vmem_usage(c, w, hk, tr, s_lanes, in_bpe, out_bpe) > budget:
        hk -= 128
    return hk, -(-h // hk)


def fast_base_transform(img, size: int, *, out_dtype=jnp.float32,
                        channels_last=True, row_tile=None, max_k_rows=None):
    """JAX/Pallas equivalent of FastBaseTransform(size).forward(img).

    img: (B, H, W, C) pixels in [0, 255] (uint8 / int / float).  With
    channels_last=False the input is taken as already-planar (B, C, H, W),
    which skips the wrapper-side NHWC->NCHW HBM pass entirely.
    out_dtype: keep jnp.float32 for exact torch semantics; bf16 halves the
    dominant (output) HBM writeback stream if the consumer allows it.
    row_tile / max_k_rows: tuning / test overrides for the output-row tile and
    the image K (input-row) chunk size."""
    if channels_last:
        b, h, w, c = img.shape
        x = jnp.transpose(img, (0, 3, 1, 2))
    else:
        b, c, h, w = img.shape
        x = img
    # Keep the kernel input narrow: 8-bit inputs pass through untouched, wider
    # inputs travel as bf16 (integer pixel values 0..255 are exact in bf16;
    # XLA fuses the transpose + convert into a single copy pass).
    if np.dtype(x.dtype).itemsize != 1 and x.dtype != jnp.bfloat16:
        x = x.astype(jnp.bfloat16)
    # TODO(synk): fold the NHWC channel de-interleave into the kernel's DMA
    # path (strided lane loads) so NHWC producers skip the transpose pass too.

    new_h, new_w, top_pad, left_pad = _resize_geometry(h, w, size)

    # ---------------- device-aware tiling ----------------
    try:
        vmem_cap = int(pltpu.get_tpu_info().vmem_capacity_bytes)
    except Exception:
        vmem_cap = 128 << 20
    two_cores = vmem_cap <= (64 << 20)   # v7x heuristic: 64 MiB VMEM, 2 TCs

    if row_tile is not None:
        tr = _round_up(int(row_tile), 8)
    else:
        tr = _choose_row_tile(size, b, two_cores)
    n_rt = -(-size // tr)
    r_pad = n_rt * tr
    # Lane-dense output: pad the minor dim to a multiple of 128 (sliced below).
    s_lanes = size if size < 128 else _round_up(size, 128)

    in_bpe = np.dtype(x.dtype).itemsize
    out_bpe = np.dtype(out_dtype).itemsize
    k_rows, n_kt = _choose_k_rows(h, w, c, tr, s_lanes, in_bpe, out_bpe,
                                  vmem_cap - (8 << 20), max_k_rows)
    h_pad = n_kt * k_rows if n_kt > 1 else h

    usage = _vmem_usage(c, w, k_rows, tr, s_lanes, in_bpe, out_bpe)
    # Clamp the requested scoped-VMEM limit to the actual device capacity.
    vmem_limit = int(min(max(usage + (4 << 20), 32 << 20), vmem_cap - (4 << 20)))

    # ---------------- host-built operands ----------------
    # Interpolation matrices with F.pad's zero border folded in.  Wh is padded
    # with zero rows up to r_pad and zero columns up to h_pad (so every block
    # is in range); Ww is passed pre-transposed and lane-padded to s_lanes.
    wh = np.zeros((r_pad, h_pad), dtype=np.float32)
    wh[top_pad:top_pad + new_h, :h] = _bilinear_matrix(new_h, h)
    ww_t = np.zeros((w, s_lanes), dtype=np.float32)
    ww_t[:, left_pad:left_pad + new_w] = _bilinear_matrix(new_w, w).T
    wh_bf = jnp.asarray(wh, dtype=jnp.bfloat16)
    ww_t_bf = jnp.asarray(ww_t, dtype=jnp.bfloat16)

    # /255 + Normalize folded into one per-channel FMA.
    if c == 3:
        scale_np = (1.0 / (255.0 * _STD)).astype(np.float32)
        bias_np = (-_MEAN / _STD).astype(np.float32)
    else:
        scale_np = np.full((c,), 1.0 / 255.0, np.float32)
        bias_np = np.zeros((c,), np.float32)
    scale = jnp.asarray(scale_np)
    bias = jnp.asarray(bias_np)

    # ---------------- kernel ----------------
    def kernel(scale_ref, bias_ref, wh_ref, wwt_ref, img_ref, out_ref, acc_ref):
        ki = pl.program_id(2)

        @pl.when(ki == 0)
        def _init():
            acc_ref[...] = jnp.zeros_like(acc_ref)

        wh_blk = wh_ref[...]                                     # (tr, k_rows) bf16
        if n_kt > 1:
            # Mask rows of the (possibly partial) last image chunk: the part of
            # the block past h holds stale VMEM and must not reach the MXU.
            row = lax.broadcasted_iota(jnp.int32, (k_rows, 1), 0) + ki * k_rows
            row_ok = row < h

        for ci in range(c):                                      # static channel unroll
            xc = img_ref[0, ci]                                  # (k_rows, w)
            if xc.dtype != jnp.bfloat16:
                xc = xc.astype(jnp.bfloat16)                     # direct narrow cast (incl. uint8)
            if n_kt > 1:
                xc = jnp.where(row_ok, xc, jnp.zeros_like(xc))
            acc_ref[pl.ds(ci * tr, tr), :] += jnp.dot(
                wh_blk, xc, preferred_element_type=jnp.float32)

        # After the last K chunk: one batched (c*tr, w) x (w, s_lanes) matmul,
        # per-channel FMA epilogue, lane-dense stores.
        @pl.when(ki == n_kt - 1)
        def _finalize():
            tmp = acc_ref[...].astype(jnp.bfloat16)              # (c*tr, w)
            plane = jnp.dot(tmp, wwt_ref[...],
                            preferred_element_type=jnp.float32)  # (c*tr, s_lanes)
            for ci in range(c):
                seg = plane[ci * tr:(ci + 1) * tr, :]
                out_ref[0, ci] = (seg * scale_ref[ci]
                                  + bias_ref[ci]).astype(out_ref.dtype)

    def run(single_buffer_const):
        wwt_kwargs = dict(pipeline_mode=pl.Buffered(1)) if single_buffer_const else {}
        grid_spec = pltpu.PrefetchScalarGridSpec(
            num_scalar_prefetch=0,
            grid=(b, n_rt, n_kt),
            in_specs=[
                pl.BlockSpec((c,), lambda bi, ri, ki: (0,),
                             memory_space=pltpu.SMEM),                        # scale
                pl.BlockSpec((c,), lambda bi, ri, ki: (0,),
                             memory_space=pltpu.SMEM),                        # bias
                pl.BlockSpec((tr, k_rows), lambda bi, ri, ki: (ri, ki)),      # Wh tile
                pl.BlockSpec((w, s_lanes), lambda bi, ri, ki: (0, 0),
                             **wwt_kwargs),                                   # Ww^T (grid-invariant)
                pl.BlockSpec((1, c, k_rows, w),
                             lambda bi, ri, ki: (bi, 0, ki, 0)),              # image chunk
            ],
            out_specs=pl.BlockSpec((1, c, tr, s_lanes),
                                   lambda bi, ri, ki: (bi, 0, ri, 0)),
            scratch_shapes=[pltpu.VMEM((c * tr, w), jnp.float32)],            # K accumulator
        )
        return pl.pallas_call(
            kernel,
            out_shape=jax.ShapeDtypeStruct((b, c, r_pad, s_lanes), out_dtype),
            grid_spec=grid_spec,
            compiler_params=pltpu.CompilerParams(
                dimension_semantics=("parallel", "parallel", "arbitrary"),
                vmem_limit_bytes=vmem_limit),
        )(scale, bias, wh_bf, ww_t_bf, x)

    try:
        out = run(True)
    except Exception:
        # Graceful fallback for Pallas versions that reject a single-buffered
        # pipeline_mode on the grid-invariant operand.
        out = run(False)

    # Drop the row/lane padding, then apply the torch glue:
    # img.squeeze() removes ALL size-1 dims (matching torch); c != 3 -> unsqueeze(0).
    if r_pad != size or s_lanes != size:
        out = out[:, :, :size, :size]
    out = jnp.squeeze(out)
    if c != 3:
        out = jnp.expand_dims(out, 0)
    return out


def _numpy_reference(img, size: int, emulate_bf16: bool = False):
    """Reference of the torch forward.  With emulate_bf16=True the matmul
    operands are rounded to bf16 exactly as the kernel does (tight check);
    with False it is the exact f32 torch semantics (loose check)."""
    def bf16(a):
        return np.asarray(jnp.asarray(a).astype(jnp.bfloat16).astype(jnp.float32))

    img = np.asarray(img, np.float32)
    b, h, w, c = img.shape
    x = np.transpose(img, (0, 3, 1, 2))
    new_h, new_w, top, left = _resize_geometry(h, w, size)
    wh = np.zeros((size, h), np.float32)
    wh[top:top + new_h, :] = _bilinear_matrix(new_h, h)
    ww = np.zeros((size, w), np.float32)
    ww[left:left + new_w, :] = _bilinear_matrix(new_w, w)
    if emulate_bf16:
        wh, ww, x = bf16(wh), bf16(ww), bf16(x)
    tmp = np.einsum('oh,bchw->bcow', wh, x).astype(np.float32)
    if emulate_bf16:
        tmp = bf16(tmp)
    res = np.einsum('bcow,pw->bcop', tmp, ww).astype(np.float32)
    res = res / np.float32(255.0)
    res = np.squeeze(res)
    if c == 3:
        res = (res - _MEAN.reshape(-1, 1, 1)) / _STD.reshape(-1, 1, 1)
    else:
        res = np.expand_dims(res, 0)
    return res.astype(np.float32)


if __name__ == "__main__":
    # (B, H, W, C, SIZE, kwargs)
    cases = [
        (2, 10, 20, 3, 16, {}),                # h < w  -> top/bottom pad, batch 2
        (1, 24, 16, 3, 20, {}),                # h >= w -> left/right pad, B==1 squeeze,
                                               #           row-padded output (20 -> 24 rows)
        (1, 200, 160, 3, 160,                  # K-tiled image (2 chunks, masked tail),
         dict(row_tile=80, max_k_rows=128)),   # 2 row tiles, lane-padded output (160 -> 256)
    ]
    key = jax.random.PRNGKey(0)
    for (B, H, W, C, SIZE, kw) in cases:
        key, sub = jax.random.split(key)
        img = jax.random.randint(sub, (B, H, W, C), 0, 256, dtype=jnp.int32)
        img = img.astype(jnp.float32)   # float pixel values in [0, 255]

        out = jax.block_until_ready(fast_base_transform(img, SIZE, **kw))
        out_np = np.asarray(out)

        # Tight check: reference with the same bf16 matmul operands.
        ref_bf = _numpy_reference(np.asarray(img), SIZE, emulate_bf16=True)
        np.testing.assert_allclose(out_np, ref_bf, rtol=1e-5, atol=1e-4)

        # Sanity check against exact f32 torch semantics (bf16 MXU operands
        # introduce at most ~0.05 absolute error on the normalized scale).
        ref_f32 = _numpy_reference(np.asarray(img), SIZE, emulate_bf16=False)
        np.testing.assert_allclose(out_np, ref_f32, rtol=0.0, atol=6e-2)

    print("KERNEL_OK")
</pallas_src>

<mosaic_0001>
module attributes {stable_mosaic.version = 11 : i64} {
  func.func @kernel(%arg0: i32, %arg1: i32, %arg2: i32, %arg3: memref<3xf32, #tpu.memory_space<smem>>, %arg4: memref<3xf32, #tpu.memory_space<smem>>, %arg5: memref<16x10xbf16, #tpu.memory_space<vmem>>, %arg6: memref<20x16xbf16, #tpu.memory_space<vmem>>, %arg7: memref<1x3x10x20xbf16, #tpu.memory_space<vmem>>, %arg8: memref<1x3x16x16xf32, #tpu.memory_space<vmem>>, %arg9: memref<48x20xf32, #tpu.memory_space<vmem>>) attributes {dimension_semantics = [#tpu.dimension_semantics<parallel>, #tpu.dimension_semantics<parallel>, #tpu.dimension_semantics<arbitrary>], iteration_bounds = array<i64: 2, 1, 1>, scalar_prefetch = 0 : i64, scratch_operands = 1 : i64, tpu.core_type = #tpu.core_type<tc>, window_params = [{transform_indices = @transform_0, window_bounds = array<i64: 3>}, {transform_indices = @transform_1, window_bounds = array<i64: 3>}, {transform_indices = @transform_2, window_bounds = array<i64: 16, 10>}, {pipeline_mode = #tpu.pipeline_mode<synchronous>, transform_indices = @transform_3, window_bounds = array<i64: 20, 16>}, {transform_indices = @transform_4, window_bounds = array<i64: 1, 3, 10, 20>}, {transform_indices = @transform_5, window_bounds = array<i64: 1, 3, 16, 16>}]} {
    %c0_i32 = arith.constant 0 : i32
    %0 = arith.cmpi eq, %arg2, %c0_i32 : i32
    %1 = arith.extui %0 : i1 to i32
    %c0_i32_0 = arith.constant 0 : i32
    %2 = arith.cmpi ne, %1, %c0_i32_0 : i32
    scf.if %2 {
      %cst_26 = arith.constant 0.000000e+00 : f32
      %25 = vector.broadcast %cst_26 : f32 to vector<48x20xf32>
      %c0_27 = arith.constant 0 : index
      %c0_28 = arith.constant 0 : index
      %26 = vector.load %arg9[%c0_27, %c0_28] : memref<48x20xf32, #tpu.memory_space<vmem>>, vector<48x20xf32>
      tpu.vector_store %arg9[%c0_27, %c0_28], %25 {strides = array<i32>} : memref<48x20xf32, #tpu.memory_space<vmem>>, vector<48x20xf32>,
    } else {
    }
    %c0 = arith.constant 0 : index
    %c0_1 = arith.constant 0 : index
    %3 = vector.load %arg5[%c0, %c0_1] : memref<16x10xbf16, #tpu.memory_space<vmem>>, vector<16x10xbf16>
    %c0_2 = arith.constant 0 : index
    %c0_3 = arith.constant 0 : index
    %c0_4 = arith.constant 0 : index
    %c0_5 = arith.constant 0 : index
    %4 = vector.load %arg7[%c0_2, %c0_3, %c0_4, %c0_5] : memref<1x3x10x20xbf16, #tpu.memory_space<vmem>>, vector<1x1x10x20xbf16>
    %5 = vector.shape_cast %4 : vector<1x1x10x20xbf16> to vector<10x20xbf16>
    %c0_6 = arith.constant 0 : index
    %c0_7 = arith.constant 0 : index
    %6 = vector.load %arg9[%c0_6, %c0_7] : memref<48x20xf32, #tpu.memory_space<vmem>>, vector<16x20xf32>
    %cst = arith.constant dense<0.000000e+00> : vector<16x20xf32>
    %7 = tpu.matmul %3, %5, %cst {dimension_numbers = #tpu.dot_dimension_numbers<[1], [0], [0], [1], [0, 0, 1, 1], [], []>} : vector<16x10xbf16>, vector<10x20xbf16>, vector<16x20xf32> -> vector<16x20xf32>
    %8 = arith.addf %6, %7 : vector<16x20xf32>
    %c0_8 = arith.constant 0 : index
    %c0_9 = arith.constant 0 : index
    %9 = vector.load %arg9[%c0_8, %c0_9] : memref<48x20xf32, #tpu.memory_space<vmem>>, vector<16x20xf32>
    tpu.vector_store %arg9[%c0_8, %c0_9], %8 {strides = array<i32>} : memref<48x20xf32, #tpu.memory_space<vmem>>, vector<16x20xf32>,
    %c0_10 = arith.constant 0 : index
    %c1 = arith.constant 1 : index
    %c0_11 = arith.constant 0 : index
    %c0_12 = arith.constant 0 : index
    %10 = vector.load %arg7[%c0_10, %c1, %c0_11, %c0_12] : memref<1x3x10x20xbf16, #tpu.memory_space<vmem>>, vector<1x1x10x20xbf16>
    %11 = vector.shape_cast %10 : vector<1x1x10x20xbf16> to vector<10x20xbf16>
    %c16 = arith.constant 16 : index
    %c0_13 = arith.constant 0 : index
    %12 = vector.load %arg9[%c16, %c0_13] : memref<48x20xf32, #tpu.memory_space<vmem>>, vector<16x20xf32>
    %cst_14 = arith.constant dense<0.000000e+00> : vector<16x20xf32>
    %13 = tpu.matmul %3, %11, %cst_14 {dimension_numbers = #tpu.dot_dimension_numbers<[1], [0], [0], [1], [0, 0, 1, 1], [], []>} : vector<16x10xbf16>, vector<10x20xbf16>, vector<16x20xf32> -> vector<16x20xf32>
    %14 = arith.addf %12, %13 : vector<16x20xf32>
    %c16_15 = arith.constant 16 : index
    %c0_16 = arith.constant 0 : index
    %15 = vector.load %arg9[%c16_15, %c0_16] : memref<48x20xf32, #tpu.memory_space<vmem>>, vector<16x20xf32>
    tpu.vector_store %arg9[%c16_15, %c0_16], %14 {strides = array<i32>} : memref<48x20xf32, #tpu.memory_space<vmem>>, vector<16x20xf32>,
    %c0_17 = arith.constant 0 : index
    %c2 = arith.constant 2 : index
    %c0_18 = arith.constant 0 : index
    %c0_19 = arith.constant 0 : index
    %16 = vector.load %arg7[%c0_17, %c2, %c0_18, %c0_19] : memref<1x3x10x20xbf16, #tpu.memory_space<vmem>>, vector<1x1x10x20xbf16>
    %17 = vector.shape_cast %16 : vector<1x1x10x20xbf16> to vector<10x20xbf16>
    %c32 = arith.constant 32 : index
    %c0_20 = arith.constant 0 : index
    %18 = vector.load %arg9[%c32, %c0_20] : memref<48x20xf32, #tpu.memory_space<vmem>>, vector<16x20xf32>
    %cst_21 = arith.constant dense<0.000000e+00> : vector<16x20xf32>
    %19 = tpu.matmul %3, %17, %cst_21 {dimension_numbers = #tpu.dot_dimension_numbers<[1], [0], [0], [1], [0, 0, 1, 1], [], []>} : vector<16x10xbf16>, vector<10x20xbf16>, vector<16x20xf32> -> vector<16x20xf32>
    %20 = arith.addf %18, %19 : vector<16x20xf32>
    %c32_22 = arith.constant 32 : index
    %c0_23 = arith.constant 0 : index
    %21 = vector.load %arg9[%c32_22, %c0_23] : memref<48x20xf32, #tpu.memory_space<vmem>>, vector<16x20xf32>
    tpu.vector_store %arg9[%c32_22, %c0_23], %20 {strides = array<i32>} : memref<48x20xf32, #tpu.memory_space<vmem>>, vector<16x20xf32>,
    %c0_i32_24 = arith.constant 0 : i32
    %22 = arith.cmpi eq, %arg2, %c0_i32_24 : i32
    %23 = arith.extui %22 : i1 to i32
    %c0_i32_25 = arith.constant 0 : i32
    %24 = arith.cmpi ne, %23, %c0_i32_25 : i32
    scf.if %24 {
      %c0_26 = arith.constant 0 : index
      %c0_27 = arith.constant 0 : index
      %25 = vector.load %arg9[%c0_26, %c0_27] : memref<48x20xf32, #tpu.memory_space<vmem>>, vector<48x20xf32>
      %26 = arith.truncf %25 : vector<48x20xf32> to vector<48x20xbf16>
      %c0_28 = arith.constant 0 : index
      %c0_29 = arith.constant 0 : index
      %27 = vector.load %arg6[%c0_28, %c0_29] : memref<20x16xbf16, #tpu.memory_space<vmem>>, vector<20x16xbf16>
      %cst_30 = arith.constant dense<0.000000e+00> : vector<48x16xf32>
      %28 = tpu.matmul %26, %27, %cst_30 {dimension_numbers = #tpu.dot_dimension_numbers<[1], [0], [0], [1], [0, 0, 1, 1], [], []>} : vector<48x20xbf16>, vector<20x16xbf16>, vector<48x16xf32> -> vector<48x16xf32>
      %29 = vector.extract_strided_slice %28 {offsets = [0, 0], sizes = [16, 16], strides = [1, 1]} : vector<48x16xf32> to vector<16x16xf32>
      %c0_31 = arith.constant 0 : index
      %30 = memref.load %arg3[%c0_31] : memref<3xf32, #tpu.memory_space<smem>>
      %31 = vector.broadcast %30 : f32 to vector<16x16xf32>
      %32 = arith.mulf %29, %31 : vector<16x16xf32>
      %c0_32 = arith.constant 0 : index
      %33 = memref.load %arg4[%c0_32] : memref<3xf32, #tpu.memory_space<smem>>
      %34 = vector.broadcast %33 : f32 to vector<16x16xf32>
      %35 = arith.addf %32, %34 : vector<16x16xf32>
      %c0_33 = arith.constant 0 : index
      %c0_34 = arith.constant 0 : index
      %c0_35 = arith.constant 0 : index
      %c0_36 = arith.constant 0 : index
      %36 = vector.load %arg8[%c0_33, %c0_34, %c0_35, %c0_36] : memref<1x3x16x16xf32, #tpu.memory_space<vmem>>, vector<1x1x16x16xf32>
      %37 = vector.shape_cast %36 : vector<1x1x16x16xf32> to vector<16x16xf32>
      %38 = vector.shape_cast %35 : vector<16x16xf32> to vector<1x1x16x16xf32>
      tpu.vector_store %arg8[%c0_33, %c0_34, %c0_35, %c0_36], %38 {strides = array<i32>} : memref<1x3x16x16xf32, #tpu.memory_space<vmem>>, vector<1x1x16x16xf32>,
      %39 = vector.extract_strided_slice %28 {offsets = [16, 0], sizes = [16, 16], strides = [1, 1]} : vector<48x16xf32> to vector<16x16xf32>
      %c1_37 = arith.constant 1 : index
      %40 = memref.load %arg3[%c1_37] : memref<3xf32, #tpu.memory_space<smem>>
      %41 = vector.broadcast %40 : f32 to vector<16x16xf32>
      %42 = arith.mulf %39, %41 : vector<16x16xf32>
      %c1_38 = arith.constant 1 : index
      %43 = memref.load %arg4[%c1_38] : memref<3xf32, #tpu.memory_space<smem>>
      %44 = vector.broadcast %43 : f32 to vector<16x16xf32>
      %45 = arith.addf %42, %44 : vector<16x16xf32>
      %c0_39 = arith.constant 0 : index
      %c1_40 = arith.constant 1 : index
      %c0_41 = arith.constant 0 : index
      %c0_42 = arith.constant 0 : index
      %46 = vector.load %arg8[%c0_39, %c1_40, %c0_41, %c0_42] : memref<1x3x16x16xf32, #tpu.memory_space<vmem>>, vector<1x1x16x16xf32>
      %47 = vector.shape_cast %46 : vector<1x1x16x16xf32> to vector<16x16xf32>
      %48 = vector.shape_cast %45 : vector<16x16xf32> to vector<1x1x16x16xf32>
      tpu.vector_store %arg8[%c0_39, %c1_40, %c0_41, %c0_42], %48 {strides = array<i32>} : memref<1x3x16x16xf32, #tpu.memory_space<vmem>>, vector<1x1x16x16xf32>,
      %49 = vector.extract_strided_slice %28 {offsets = [32, 0], sizes = [16, 16], strides = [1, 1]} : vector<48x16xf32> to vector<16x16xf32>
      %c2_43 = arith.constant 2 : index
      %50 = memref.load %arg3[%c2_43] : memref<3xf32, #tpu.memory_space<smem>>
      %51 = vector.broadcast %50 : f32 to vector<16x16xf32>
      %52 = arith.mulf %49, %51 : vector<16x16xf32>
      %c2_44 = arith.constant 2 : index
      %53 = memref.load %arg4[%c2_44] : memref<3xf32, #tpu.memory_space<smem>>
      %54 = vector.broadcast %53 : f32 to vector<16x16xf32>
      %55 = arith.addf %52, %54 : vector<16x16xf32>
      %c0_45 = arith.constant 0 : index
      %c2_46 = arith.constant 2 : index
      %c0_47 = arith.constant 0 : index
      %c0_48 = arith.constant 0 : index
      %56 = vector.load %arg8[%c0_45, %c2_46, %c0_47, %c0_48] : memref<1x3x16x16xf32, #tpu.memory_space<vmem>>, vector<1x1x16x16xf32>
      %57 = vector.shape_cast %56 : vector<1x1x16x16xf32> to vector<16x16xf32>
      %58 = vector.shape_cast %55 : vector<16x16xf32> to vector<1x1x16x16xf32>
      tpu.vector_store %arg8[%c0_45, %c2_46, %c0_47, %c0_48], %58 {strides = array<i32>} : memref<1x3x16x16xf32, #tpu.memory_space<vmem>>, vector<1x1x16x16xf32>,
    } else {
    }
    return
  }
  func.func @transform_0(%arg0: i32, %arg1: i32, %arg2: i32) -> i32 {
    %c0_i32 = arith.constant 0 : i32
    %c0_i32_0 = arith.constant 0 : i32
    return %c0_i32 : i32
  }
  func.func @transform_1(%arg0: i32, %arg1: i32, %arg2: i32) -> i32 {
    %c0_i32 = arith.constant 0 : i32
    %c0_i32_0 = arith.constant 0 : i32
    return %c0_i32 : i32
  }
  func.func @transform_2(%arg0: i32, %arg1: i32, %arg2: i32) -> (i32, i32) {
    %c0_i32 = arith.constant 0 : i32
    return %arg1, %arg2 : i32, i32
  }
  func.func @transform_3(%arg0: i32, %arg1: i32, %arg2: i32) -> (i32, i32) {
    %c0_i32 = arith.constant 0 : i32
    %c0_i32_0 = arith.constant 0 : i32
    %c0_i32_1 = arith.constant 0 : i32
    return %c0_i32, %c0_i32_0 : i32, i32
  }
  func.func @transform_4(%arg0: i32, %arg1: i32, %arg2: i32) -> (i32, i32, i32, i32) {
    %c0_i32 = arith.constant 0 : i32
    %c0_i32_0 = arith.constant 0 : i32
    %c0_i32_1 = arith.constant 0 : i32
    return %arg0, %c0_i32, %arg2, %c0_i32_0 : i32, i32, i32, i32
  }
  func.func @transform_5(%arg0: i32, %arg1: i32, %arg2: i32) -> (i32, i32, i32, i32) {
    %c0_i32 = arith.constant 0 : i32
    %c0_i32_0 = arith.constant 0 : i32
    %c0_i32_1 = arith.constant 0 : i32
    return %arg0, %c0_i32, %arg1, %c0_i32_0 : i32, i32, i32, i32
  }
}

module attributes {stable_mosaic.version = 11 : i64} {
  func.func @kernel(%arg0: i32, %arg1: i32, %arg2: i32, %arg3: memref<3xf32, #tpu.memory_space<smem>>, %arg4: memref<3xf32, #tpu.memory_space<smem>>, %arg5: memref<16x10xbf16, #tpu.memory_space<vmem>>, %arg6: memref<20x16xbf16, #tpu.memory_space<vmem>>, %arg7: memref<1x3x10x20xbf16, #tpu.memory_space<vmem>>, %arg8: memref<1x3x16x16xf32, #tpu.memory_space<vmem>>, %arg9: memref<48x20xf32, #tpu.memory_space<vmem>>) attributes {dimension_semantics = [#tpu.dimension_semantics<parallel>, #tpu.dimension_semantics<parallel>, #tpu.dimension_semantics<arbitrary>], iteration_bounds = array<i64: 2, 1, 1>, scalar_prefetch = 0 : i64, scratch_operands = 1 : i64, tpu.core_type = #tpu.core_type<tc>, window_params = [{transform_indices = @transform_0, window_bounds = array<i64: 3>}, {transform_indices = @transform_1, window_bounds = array<i64: 3>}, {transform_indices = @transform_2, window_bounds = array<i64: 16, 10>}, {pipeline_mode = #tpu.pipeline_mode<synchronous>, transform_indices = @transform_3, window_bounds = array<i64: 20, 16>}, {transform_indices = @transform_4, window_bounds = array<i64: 1, 3, 10, 20>}, {transform_indices = @transform_5, window_bounds = array<i64: 1, 3, 16, 16>}]} {
    %c0_i32 = arith.constant 0 : i32
    %0 = arith.cmpi eq, %arg2, %c0_i32 : i32
    %1 = arith.extui %0 : i1 to i32
    %c0_i32_0 = arith.constant 0 : i32
    %2 = arith.cmpi ne, %1, %c0_i32_0 : i32
    scf.if %2 {
      %cst_26 = arith.constant 0.000000e+00 : f32
      %25 = vector.broadcast %cst_26 : f32 to vector<48x20xf32>
      %c0_27 = arith.constant 0 : index
      %c0_28 = arith.constant 0 : index
      %26 = vector.load %arg9[%c0_27, %c0_28] : memref<48x20xf32, #tpu.memory_space<vmem>>, vector<48x20xf32>
      tpu.vector_store %arg9[%c0_27, %c0_28], %25 {strides = array<i32>} : memref<48x20xf32, #tpu.memory_space<vmem>>, vector<48x20xf32>,
    } else {
    }
    %c0 = arith.constant 0 : index
    %c0_1 = arith.constant 0 : index
    %3 = vector.load %arg5[%c0, %c0_1] : memref<16x10xbf16, #tpu.memory_space<vmem>>, vector<16x10xbf16>
    %c0_2 = arith.constant 0 : index
    %c0_3 = arith.constant 0 : index
    %c0_4 = arith.constant 0 : index
    %c0_5 = arith.constant 0 : index
    %4 = vector.load %arg7[%c0_2, %c0_3, %c0_4, %c0_5] : memref<1x3x10x20xbf16, #tpu.memory_space<vmem>>, vector<1x1x10x20xbf16>
    %5 = vector.shape_cast %4 : vector<1x1x10x20xbf16> to vector<10x20xbf16>
    %c0_6 = arith.constant 0 : index
    %c0_7 = arith.constant 0 : index
    %6 = vector.load %arg9[%c0_6, %c0_7] : memref<48x20xf32, #tpu.memory_space<vmem>>, vector<16x20xf32>
    %cst = arith.constant dense<0.000000e+00> : vector<16x20xf32>
    %7 = tpu.matmul %3, %5, %cst {dimension_numbers = #tpu.dot_dimension_numbers<[1], [0], [0], [1], [0, 0, 1, 1], [], []>} : vector<16x10xbf16>, vector<10x20xbf16>, vector<16x20xf32> -> vector<16x20xf32>
    %8 = arith.addf %6, %7 : vector<16x20xf32>
    %c0_8 = arith.constant 0 : index
    %c0_9 = arith.constant 0 : index
    %9 = vector.load %arg9[%c0_8, %c0_9] : memref<48x20xf32, #tpu.memory_space<vmem>>, vector<16x20xf32>
    tpu.vector_store %arg9[%c0_8, %c0_9], %8 {strides = array<i32>} : memref<48x20xf32, #tpu.memory_space<vmem>>, vector<16x20xf32>,
    %c0_10 = arith.constant 0 : index
    %c1 = arith.constant 1 : index
    %c0_11 = arith.constant 0 : index
    %c0_12 = arith.constant 0 : index
    %10 = vector.load %arg7[%c0_10, %c1, %c0_11, %c0_12] : memref<1x3x10x20xbf16, #tpu.memory_space<vmem>>, vector<1x1x10x20xbf16>
    %11 = vector.shape_cast %10 : vector<1x1x10x20xbf16> to vector<10x20xbf16>
    %c16 = arith.constant 16 : index
    %c0_13 = arith.constant 0 : index
    %12 = vector.load %arg9[%c16, %c0_13] : memref<48x20xf32, #tpu.memory_space<vmem>>, vector<16x20xf32>
    %cst_14 = arith.constant dense<0.000000e+00> : vector<16x20xf32>
    %13 = tpu.matmul %3, %11, %cst_14 {dimension_numbers = #tpu.dot_dimension_numbers<[1], [0], [0], [1], [0, 0, 1, 1], [], []>} : vector<16x10xbf16>, vector<10x20xbf16>, vector<16x20xf32> -> vector<16x20xf32>
    %14 = arith.addf %12, %13 : vector<16x20xf32>
    %c16_15 = arith.constant 16 : index
    %c0_16 = arith.constant 0 : index
    %15 = vector.load %arg9[%c16_15, %c0_16] : memref<48x20xf32, #tpu.memory_space<vmem>>, vector<16x20xf32>
    tpu.vector_store %arg9[%c16_15, %c0_16], %14 {strides = array<i32>} : memref<48x20xf32, #tpu.memory_space<vmem>>, vector<16x20xf32>,
    %c0_17 = arith.constant 0 : index
    %c2 = arith.constant 2 : index
    %c0_18 = arith.constant 0 : index
    %c0_19 = arith.constant 0 : index
    %16 = vector.load %arg7[%c0_17, %c2, %c0_18, %c0_19] : memref<1x3x10x20xbf16, #tpu.memory_space<vmem>>, vector<1x1x10x20xbf16>
    %17 = vector.shape_cast %16 : vector<1x1x10x20xbf16> to vector<10x20xbf16>
    %c32 = arith.constant 32 : index
    %c0_20 = arith.constant 0 : index
    %18 = vector.load %arg9[%c32, %c0_20] : memref<48x20xf32, #tpu.memory_space<vmem>>, vector<16x20xf32>
    %cst_21 = arith.constant dense<0.000000e+00> : vector<16x20xf32>
    %19 = tpu.matmul %3, %17, %cst_21 {dimension_numbers = #tpu.dot_dimension_numbers<[1], [0], [0], [1], [0, 0, 1, 1], [], []>} : vector<16x10xbf16>, vector<10x20xbf16>, vector<16x20xf32> -> vector<16x20xf32>
    %20 = arith.addf %18, %19 : vector<16x20xf32>
    %c32_22 = arith.constant 32 : index
    %c0_23 = arith.constant 0 : index
    %21 = vector.load %arg9[%c32_22, %c0_23] : memref<48x20xf32, #tpu.memory_space<vmem>>, vector<16x20xf32>
    tpu.vector_store %arg9[%c32_22, %c0_23], %20 {strides = array<i32>} : memref<48x20xf32, #tpu.memory_space<vmem>>, vector<16x20xf32>,
    %c0_i32_24 = arith.constant 0 : i32
    %22 = arith.cmpi eq, %arg2, %c0_i32_24 : i32
    %23 = arith.extui %22 : i1 to i32
    %c0_i32_25 = arith.constant 0 : i32
    %24 = arith.cmpi ne, %23, %c0_i32_25 : i32
    scf.if %24 {
      %c0_26 = arith.constant 0 : index
      %c0_27 = arith.constant 0 : index
      %25 = vector.load %arg9[%c0_26, %c0_27] : memref<48x20xf32, #tpu.memory_space<vmem>>, vector<48x20xf32>
      %26 = arith.truncf %25 : vector<48x20xf32> to vector<48x20xbf16>
      %c0_28 = arith.constant 0 : index
      %c0_29 = arith.constant 0 : index
      %27 = vector.load %arg6[%c0_28, %c0_29] : memref<20x16xbf16, #tpu.memory_space<vmem>>, vector<20x16xbf16>
      %cst_30 = arith.constant dense<0.000000e+00> : vector<48x16xf32>
      %28 = tpu.matmul %26, %27, %cst_30 {dimension_numbers = #tpu.dot_dimension_numbers<[1], [0], [0], [1], [0, 0, 1, 1], [], []>} : vector<48x20xbf16>, vector<20x16xbf16>, vector<48x16xf32> -> vector<48x16xf32>
      %29 = vector.extract_strided_slice %28 {offsets = [0, 0], sizes = [16, 16], strides = [1, 1]} : vector<48x16xf32> to vector<16x16xf32>
      %c0_31 = arith.constant 0 : index
      %30 = memref.load %arg3[%c0_31] : memref<3xf32, #tpu.memory_space<smem>>
      %31 = vector.broadcast %30 : f32 to vector<16x16xf32>
      %32 = arith.mulf %29, %31 : vector<16x16xf32>
      %c0_32 = arith.constant 0 : index
      %33 = memref.load %arg4[%c0_32] : memref<3xf32, #tpu.memory_space<smem>>
      %34 = vector.broadcast %33 : f32 to vector<16x16xf32>
      %35 = arith.addf %32, %34 : vector<16x16xf32>
      %c0_33 = arith.constant 0 : index
      %c0_34 = arith.constant 0 : index
      %c0_35 = arith.constant 0 : index
      %c0_36 = arith.constant 0 : index
      %36 = vector.load %arg8[%c0_33, %c0_34, %c0_35, %c0_36] : memref<1x3x16x16xf32, #tpu.memory_space<vmem>>, vector<1x1x16x16xf32>
      %37 = vector.shape_cast %36 : vector<1x1x16x16xf32> to vector<16x16xf32>
      %38 = vector.shape_cast %35 : vector<16x16xf32> to vector<1x1x16x16xf32>
      tpu.vector_store %arg8[%c0_33, %c0_34, %c0_35, %c0_36], %38 {strides = array<i32>} : memref<1x3x16x16xf32, #tpu.memory_space<vmem>>, vector<1x1x16x16xf32>,
      %39 = vector.extract_strided_slice %28 {offsets = [16, 0], sizes = [16, 16], strides = [1, 1]} : vector<48x16xf32> to vector<16x16xf32>
      %c1_37 = arith.constant 1 : index
      %40 = memref.load %arg3[%c1_37] : memref<3xf32, #tpu.memory_space<smem>>
      %41 = vector.broadcast %40 : f32 to vector<16x16xf32>
      %42 = arith.mulf %39, %41 : vector<16x16xf32>
      %c1_38 = arith.constant 1 : index
      %43 = memref.load %arg4[%c1_38] : memref<3xf32, #tpu.memory_space<smem>>
      %44 = vector.broadcast %43 : f32 to vector<16x16xf32>
      %45 = arith.addf %42, %44 : vector<16x16xf32>
      %c0_39 = arith.constant 0 : index
      %c1_40 = arith.constant 1 : index
      %c0_41 = arith.constant 0 : index
      %c0_42 = arith.constant 0 : index
      %46 = vector.load %arg8[%c0_39, %c1_40, %c0_41, %c0_42] : memref<1x3x16x16xf32, #tpu.memory_space<vmem>>, vector<1x1x16x16xf32>
      %47 = vector.shape_cast %46 : vector<1x1x16x16xf32> to vector<16x16xf32>
      %48 = vector.shape_cast %45 : vector<16x16xf32> to vector<1x1x16x16xf32>
      tpu.vector_store %arg8[%c0_39, %c1_40, %c0_41, %c0_42], %48 {strides = array<i32>} : memref<1x3x16x16xf32, #tpu.memory_space<vmem>>, vector<1x1x16x16xf32>,
      %49 = vector.extract_strided_slice %28 {offsets = [32, 0], sizes = [16, 16], strides = [1, 1]} : vector<48x16xf32> to vector<16x16xf32>
      %c2_43 = arith.constant 2 : index
      %50 = memref.load %arg3[%c2_43] : memref<3xf32, #tpu.memory_space<smem>>
      %51 = vector.broadcast %50 : f32 to vector<16x16xf32>
      %52 = arith.mulf %49, %51 : vector<16x16xf32>
      %c2_44 = arith.constant 2 : index
      %53 = memref.load %arg4[%c2_44] : memref<3xf32, #tpu.memory_space<smem>>
      %54 = vector.broadcast %53 : f32 to vector<16x16xf32>
      %55 = arith.addf %52, %54 : vector<16x16xf32>
      %c0_45 = arith.constant 0 : index
      %c2_46 = arith.constant 2 : index
      %c0_47 = arith.constant 0 : index
      %c0_48 = arith.constant 0 : index
      %56 = vector.load %arg8[%c0_45, %c2_46, %c0_47, %c0_48] : memref<1x3x16x16xf32, #tpu.memory_space<vmem>>, vector<1x1x16x16xf32>
      %57 = vector.shape_cast %56 : vector<1x1x16x16xf32> to vector<16x16xf32>
      %58 = vector.shape_cast %55 : vector<16x16xf32> to vector<1x1x16x16xf32>
      tpu.vector_store %arg8[%c0_45, %c2_46, %c0_47, %c0_48], %58 {strides = array<i32>} : memref<1x3x16x16xf32, #tpu.memory_space<vmem>>, vector<1x1x16x16xf32>,
    } else {
    }
    return
  }
  func.func @transform_0(%arg0: i32, %arg1: i32, %arg2: i32) -> i32 {
    %c0_i32 = arith.constant 0 : i32
    %c0_i32_0 = arith.constant 0 : i32
    return %c0_i32 : i32
  }
  func.func @transform_1(%arg0: i32, %arg1: i32, %arg2: i32) -> i32 {
    %c0_i32 = arith.constant 0 : i32
    %c0_i32_0 = arith.constant 0 : i32
    return %c0_i32 : i32
  }
  func.func @transform_2(%arg0: i32, %arg1: i32, %arg2: i32) -> (i32, i32) {
    %c0_i32 = arith.constant 0 : i32
    return %arg1, %arg2 : i32, i32
  }
  func.func @transform_3(%arg0: i32, %arg1: i32, %arg2: i32) -> (i32, i32) {
    %c0_i32 = arith.constant 0 : i32
    %c0_i32_0 = arith.constant 0 : i32
    %c0_i32_1 = arith.constant 0 : i32
    return %c0_i32, %c0_i32_0 : i32, i32
  }
  func.func @transform_4(%arg0: i32, %arg1: i32, %arg2: i32) -> (i32, i32, i32, i32) {
    %c0_i32 = arith.constant 0 : i32
    %c0_i32_0 = arith.constant 0 : i32
    %c0_i32_1 = arith.constant 0 : i32
    return %arg0, %c0_i32, %arg2, %c0_i32_0 : i32, i32, i32, i32
  }
  func.func @transform_5(%arg0: i32, %arg1: i32, %arg2: i32) -> (i32, i32, i32, i32) {
    %c0_i32 = arith.constant 0 : i32
    %c0_i32_0 = arith.constant 0 : i32
    %c0_i32_1 = arith.constant 0 : i32
    return %arg0, %c0_i32, %arg1, %c0_i32_0 : i32, i32, i32, i32
  }
}

</mosaic_0001>

<llo_original>
// kernel: tpu_custom_call.1
$region0: #{tpu_custom_call.1}
  #allocation0 [shape = 'u32[]', space=smem, size = 0x4, offset = 0x4, fixed_abs, tag = 'smem constant byte address 0x4 - core index']
  #allocation1 [shape = 'u32[72,128]{1,0:T(1,128)}', space=vmem, size = 0x9000, scoped, tag = 'internal scratch']
  #allocation2 [shape = 'f32[48,20]{1,0:T(8,128)}', space=vmem, size = 0x6000, scoped, tag = 'scratch operand']
  %s0 = inlined_call_operand.vmem [shape: f32[3], index: 0, kind: input, shape index: {}]
  %s1 = inlined_call_operand.vmem [shape: f32[3], index: 1, kind: input, shape index: {}]
  %s2 = inlined_call_operand.vmem [shape: bf16[16,10], index: 2, kind: input, shape index: {}]
  %s3 = inlined_call_operand.vmem [shape: bf16[20,16], index: 3, kind: input, shape index: {}]
  %s4 = inlined_call_operand.vmem [shape: bf16[2,3,10,20], index: 4, kind: input, shape index: {}]
  %s5 = inlined_call_operand.hbm [shape: f32[2,3,16,16], index: 5, kind: output, shape index: {}]
  %s6 = sld [smem:[#allocation0]]
  $region69: #{tpu_custom_call.1} parent=0
    _
  %s8 = ssub.s32 1, %s6
  %s9 = scalar_select 0, %s8, %s6
  $region1: #{tpu_custom_call.1} parent=0
    #allocation3 [shape = 'u8[512]{0}', space=smem, size = 0x200, scoped, tag = 'input window, operand 0, single buffered']
    #allocation4 [shape = 's32[2]{0}', space=sflag, size = 0x8, scoped, tag = 'scoped memory for tpu_custom_call.1']
    #allocation5 [shape = 's32[2]{0}', space=sflag, size = 0x8, scoped, tag = 'scoped memory for tpu_custom_call.1']
    #allocation6 [shape = 'u8[512]{0}', space=smem, size = 0x200, scoped, tag = 'input window, operand 1, single buffered']
    #allocation7 [shape = 's32[1]{0}', space=sflag, size = 0x4, scoped, tag = 'scoped memory for tpu_custom_call.1']
    #allocation8 [shape = 'u8[49152]{0}', space=vmem, size = 0xc000, scoped, tag = 'output window, operand 0']
    %10 = vsyncpa [#allocation5], 0
    %11 = vsyncpa [#allocation7], 0
    %12 = vsyncpa [#allocation4], 0
    %s13 = scalar_lea.sflag [#allocation4], 1
    %14 = vsyncpa %s13, 0
    loop: start=0, step=1, limit=4
    $region2: #{tpu_custom_call.1} parent=1 // loop_pre_header
      _
    $region3: #{tpu_custom_call.1} parent=1 // loop_header
      %s16 = sphi 0, %s20
      %p17 = scmp.ge.s32.totalorder %s16, 4
      %s23 = sphi 0, %s42
      %s24 = sphi 0, %s38
      %s25 = sphi 0, %s34
      %s26 = sphi 0, %s23
      %s27 = sphi 0, %s24
      %s28 = sphi 0, %s25
      %s29 = sphi 0, %s26
      %s30 = sphi 0, %s27
      %s31 = sphi 0, %s28
      %s43 = sphi 0, %s43
      %s45 = sphi 0, %s43
      %s46 = sphi 0, %s45
      %s60 = sphi 0, %s46
      %s64 = sphi 0, %s64
      %s66 = sphi 0, %s64
      %s67 = sphi 0, %s66
      %s81 = sphi 0, %s67
      %s89 = sphi 0, %s91
      %s92 = sphi 0, %s89
      %s93 = sphi 0, %s92
      %s109 = sphi 0, %s93
      %s113 = sphi 0, %s113
      %s115 = sphi 0, %s113
      %s116 = sphi 0, %s115
      %s130 = sphi 0, %s116
      %s138 = sphi 0, %s140
      %s141 = sphi 0, %s138
      %s142 = sphi 0, %s141
      %s158 = sphi 0, %s142
      %s166 = sphi 0, %s168
      %s169 = sphi 0, %s166
      %s170 = sphi 0, %s169
      %s186 = sphi 0, %s170
    $region4: #{tpu_custom_call.1} parent=1 // loop_header_branch
      %19 = sbr.rel (%p17) target = $region8
    $region5: #{tpu_custom_call.1} parent=1 // loop_body
      %s21 = ssub.s32 %s16, 1
      %s22 = ssub.s32 %s16, 2
      %s32 = sadd.s32 1, %s25
      %p33 = scmp.ge.s32.totalorder %s32, 1
      %s34 = scalar_select %p33, 0, %s32
      %s35 = sadd.s32 1, %s24
      %s36 = scalar_select %p33, %s35, %s24
      %p37 = scmp.ge.s32.totalorder %s36, 1
      %s38 = scalar_select %p37, 0, %s36
      %s39 = sadd.s32 1, %s23
      %s40 = scalar_select %p37, %s39, %s23
      %p41 = scmp.ge.s32.totalorder %s40, 2
      %s42 = scalar_select %p41, 0, %s40
      %s44 = sadd.s32 %s43, 1
      %p47 = scmp.eq.s32.totalorder %s16, 1
      %p48 = scmp.ne.s32.totalorder %s43, %s45
      %p49 = scmp.eq.s32.totalorder %s16, 0
      %p50 = por %p48, %p49
      %p51 = scmp.ne.s32.totalorder %s43, %s45
      %p52 = scmp.eq.s32.totalorder %s21, 1
      %p53 = por %p51, %p52
      %p54 = scmp.ne.s32.totalorder %s45, %s46
      %p55 = scmp.eq.s32.totalorder %s21, 0
      %p56 = por %p54, %p55
      %p57 = scmp.ne.s32.totalorder %s45, %s46
      %p58 = scmp.eq.s32.totalorder %s22, 1
      %p59 = por %p57, %p58
      %p61 = scmp.ne.s32.totalorder %s46, %s60
      %p62 = scmp.eq.s32.totalorder %s22, 0
      %p63 = por %p61, %p62
      %s65 = sadd.s32 %s64, 1
      %p68 = scmp.eq.s32.totalorder %s16, 1
      %p69 = scmp.ne.s32.totalorder %s64, %s66
      %p70 = scmp.eq.s32.totalorder %s16, 0
      %p71 = por %p69, %p70
      %p72 = scmp.ne.s32.totalorder %s64, %s66
      %p73 = scmp.eq.s32.totalorder %s21, 1
      %p74 = por %p72, %p73
      %p75 = scmp.ne.s32.totalorder %s66, %s67
      %p76 = scmp.eq.s32.totalorder %s21, 0
      %p77 = por %p75, %p76
      %p78 = scmp.ne.s32.totalorder %s66, %s67
      %p79 = scmp.eq.s32.totalorder %s22, 1
      %p80 = por %p78, %p79
      %p82 = scmp.ne.s32.totalorder %s67, %s81
      %p83 = scmp.eq.s32.totalorder %s22, 0
      %p84 = por %p82, %p83
      %s85 = ssub.s32 %s24, %s38
      %s86 = ssub.s32 %s25, %s34
      %s87 = sor.u32 %s85, %s86
      %p88 = scmp.eq.s32.totalorder %s87, 0
      %s90 = sadd.s32 %s89, 1
      %s91 = scalar_select %p88, %s89, %s90
      %p94 = pneg %p88
      %p95 = scmp.eq.s32.totalorder %s16, 1
      %p96 = por %p94, %p95
      %p97 = scmp.ne.s32.totalorder %s89, %s92
      %p98 = scmp.eq.s32.totalorder %s16, 0
      %p99 = por %p97, %p98
      %p100 = scmp.ne.s32.totalorder %s89, %s92
      %p101 = scmp.eq.s32.totalorder %s21, 1
      %p102 = por %p100, %p101
      %p103 = scmp.ne.s32.totalorder %s92, %s93
      %p104 = scmp.eq.s32.totalorder %s21, 0
      %p105 = por %p103, %p104
      %p106 = scmp.ne.s32.totalorder %s92, %s93
      %p107 = scmp.eq.s32.totalorder %s22, 1
      %p108 = por %p106, %p107
      %p110 = scmp.ne.s32.totalorder %s93, %s109
      %p111 = scmp.eq.s32.totalorder %s22, 0
      %p112 = por %p110, %p111
      %s114 = sadd.s32 %s113, 1
      %p117 = scmp.eq.s32.totalorder %s16, 1
      %p118 = scmp.ne.s32.totalorder %s113, %s115
      %p119 = scmp.eq.s32.totalorder %s16, 0
      %p120 = por %p118, %p119
      %p121 = scmp.ne.s32.totalorder %s113, %s115
      %p122 = scmp.eq.s32.totalorder %s21, 1
      %p123 = por %p121, %p122
      %p124 = scmp.ne.s32.totalorder %s115, %s116
      %p125 = scmp.eq.s32.totalorder %s21, 0
      %p126 = por %p124, %p125
      %p127 = scmp.ne.s32.totalorder %s115, %s116
      %p128 = scmp.eq.s32.totalorder %s22, 1
      %p129 = por %p127, %p128
      %p131 = scmp.ne.s32.totalorder %s116, %s130
      %p132 = scmp.eq.s32.totalorder %s22, 0
      %p133 = por %p131, %p132
      %s134 = ssub.s32 %s23, %s42
      %s135 = ssub.s32 %s25, %s34
      %s136 = sor.u32 %s134, %s135
      %p137 = scmp.eq.s32.totalorder %s136, 0
      %s139 = sadd.s32 %s138, 1
      %s140 = scalar_select %p137, %s138, %s139
      %p143 = pneg %p137
      %p144 = scmp.eq.s32.totalorder %s16, 1
      %p145 = por %p143, %p144
      %p146 = scmp.ne.s32.totalorder %s138, %s141
      %p147 = scmp.eq.s32.totalorder %s16, 0
      %p148 = por %p146, %p147
      %p149 = scmp.ne.s32.totalorder %s138, %s141
      %p150 = scmp.eq.s32.totalorder %s21, 1
      %p151 = por %p149, %p150
      %p152 = scmp.ne.s32.totalorder %s141, %s142
      %p153 = scmp.eq.s32.totalorder %s21, 0
      %p154 = por %p152, %p153
      %p155 = scmp.ne.s32.totalorder %s141, %s142
      %p156 = scmp.eq.s32.totalorder %s22, 1
      %p157 = por %p155, %p156
      %p159 = scmp.ne.s32.totalorder %s142, %s158
      %p160 = scmp.eq.s32.totalorder %s22, 0
      %p161 = por %p159, %p160
      %s162 = ssub.s32 %s23, %s42
      %s163 = ssub.s32 %s24, %s38
      %s164 = sor.u32 %s162, %s163
      %p165 = scmp.eq.s32.totalorder %s164, 0
      %s167 = sadd.s32 %s166, 1
      %s168 = scalar_select %p165, %s166, %s167
      %p171 = pneg %p165
      %p172 = scmp.eq.s32.totalorder %s16, 1
      %p173 = por %p171, %p172
      %p174 = scmp.ne.s32.totalorder %s166, %s169
      %p175 = scmp.eq.s32.totalorder %s16, 0
      %p176 = por %p174, %p175
      %p177 = scmp.ne.s32.totalorder %s166, %s169
      %p178 = scmp.eq.s32.totalorder %s21, 1
      %p179 = por %p177, %p178
      %p180 = scmp.ne.s32.totalorder %s169, %s170
      %p181 = scmp.eq.s32.totalorder %s21, 0
      %p182 = por %p180, %p181
      %p183 = scmp.ne.s32.totalorder %s169, %s170
      %p184 = scmp.eq.s32.totalorder %s22, 1
      %p185 = por %p183, %p184
      %p187 = scmp.ne.s32.totalorder %s170, %s186
      %p188 = scmp.eq.s32.totalorder %s22, 0
      %p189 = por %p187, %p188
      %p190 = scmp.le.s32.totalorder 1, %s16
      %p191 = scmp.lt.s32.totalorder %s16, 3
      %p192 = pnand %p190, %p191
      %p193 = pneg %p192
      // Predicated region
      $region9: #{tpu_custom_call.1} parent=5 // pred_check
        _
      $region10: #{tpu_custom_call.1} parent=5 // pred_check_branch
        %195 = sbr.rel (%p192) target = $region12
      $region11: #{tpu_custom_call.1} parent=5 // pred_region
        %s196 = ssub.s32 %s16, 1
        // Predicated region
        $region13: #{tpu_custom_call.1} parent=11 // pred_check
          %p197 = pneg %p56
        $region14: #{tpu_custom_call.1} parent=11 // pred_check_branch
          %199 = sbr.rel (%p197) target = $region16
        $region15: #{tpu_custom_call.1} parent=11 // pred_region
          %201 = vsyncadd [#allocation5], 0
          %s203 = sshll.u32 %s0, 4
          %s204 = int_to_ptr.vmem [resolvable:$true] %s203
          %206 = dma.vmem_to_smem %s204, 16, [#allocation3], [#allocation5]
        $region16: #{tpu_custom_call.1} parent=11 // pred_fallthru
          _
        // Predicated region
        $region17: #{tpu_custom_call.1} parent=11 // pred_check
          %p207 = pneg %p77
        $region18: #{tpu_custom_call.1} parent=11 // pred_check_branch
          %209 = sbr.rel (%p207) target = $region20
        $region19: #{tpu_custom_call.1} parent=11 // pred_region
          %211 = vsyncadd [#allocation7], 0
          %s213 = sshll.u32 %s1, 4
          %s214 = int_to_ptr.vmem [resolvable:$true] %s213
          %216 = dma.vmem_to_smem %s214, 16, [#allocation6], [#allocation7]
        $region20: #{tpu_custom_call.1} parent=11 // pred_fallthru
          _
        // Predicated region
        $region21: #{tpu_custom_call.1} parent=11 // pred_check
          %p217 = pneg %p105
        $region22: #{tpu_custom_call.1} parent=11 // pred_check_branch
          %219 = sbr.rel (%p217) target = $region24
        $region23: #{tpu_custom_call.1} parent=11 // pred_region
          %s220 = smul.u32 2, %s27
          %p221 = scmp.lt.s32.totalorder %s220, 1
          %s222 = scalar_select %p221, %s220, 1
          %p223 = scmp.lt.s32.totalorder %s28, 0
          %s224 = scalar_select %p223, %s28, 0
          %s225 = sadd.s32 %s224, %s222
          %s226 = smul.addr %s225, 4
          %s227 = scalar_lea.vmem %s2, %s226
          %s228 = smul.u32 2, %s27
        $region24: #{tpu_custom_call.1} parent=11 // pred_fallthru
          _
        // Predicated region
        $region25: #{tpu_custom_call.1} parent=11 // pred_check
          %p229 = pneg %p126
        $region26: #{tpu_custom_call.1} parent=11 // pred_check_branch
          %231 = sbr.rel (%p229) target = $region28
        $region27: #{tpu_custom_call.1} parent=11 // pred_region
          _
        $region28: #{tpu_custom_call.1} parent=11 // pred_fallthru
          _
      $region12: #{tpu_custom_call.1} parent=5 // pred_fallthru
        _
      %p232 = scmp.lt.s32.totalorder %s16, 2
      // Predicated region
      $region29: #{tpu_custom_call.1} parent=5 // pred_check
        %p233 = pneg %p232
      $region30: #{tpu_custom_call.1} parent=5 // pred_check_branch
        %235 = sbr.rel (%p233) target = $region32
      $region31: #{tpu_custom_call.1} parent=5 // pred_region
        // Predicated region
        $region33: #{tpu_custom_call.1} parent=31 // pred_check
          %p236 = pneg %p148
        $region34: #{tpu_custom_call.1} parent=31 // pred_check_branch
          %238 = sbr.rel (%p236) target = $region36
        $region35: #{tpu_custom_call.1} parent=31 // pred_region
          %s239 = smul.u32 2, %s25
          %p240 = scmp.lt.s32.totalorder %s23, 1
          %s241 = scalar_select %p240, %s23, 1
          %p242 = scmp.lt.s32.totalorder %s239, 1
          %s243 = scalar_select %p242, %s239, 1
          %s244 = smul.addr %s241, 6
          %s245 = sadd.s32 %s243, %s244
          %s246 = smul.addr %s245, 4
          %s247 = scalar_lea.vmem %s4, %s246
          %s248 = smul.u32 2, %s25
        $region36: #{tpu_custom_call.1} parent=31 // pred_fallthru
          _
      $region32: #{tpu_custom_call.1} parent=5 // pred_fallthru
        _
      %p249 = scmp.le.s32.totalorder 1, %s16
      %p250 = scmp.lt.s32.totalorder %s16, 3
      %p251 = pnand %p249, %p250
      %p252 = pneg %p251
      // Predicated region
      $region37: #{tpu_custom_call.1} parent=5 // pred_check
        _
      $region38: #{tpu_custom_call.1} parent=5 // pred_check_branch
        %254 = sbr.rel (%p251) target = $region40
      $region39: #{tpu_custom_call.1} parent=5 // pred_region
        %s255 = ssub.s32 %s16, 1
        // Predicated region
        $region41: #{tpu_custom_call.1} parent=39 // pred_check
          %p256 = pneg %p56
        $region42: #{tpu_custom_call.1} parent=39 // pred_check_branch
          %258 = sbr.rel (%p256) target = $region44
        $region43: #{tpu_custom_call.1} parent=39 // pred_region
          %260 = dma.done [#allocation5], 16
        $region44: #{tpu_custom_call.1} parent=39 // pred_fallthru
          _
        // Predicated region
        $region45: #{tpu_custom_call.1} parent=39 // pred_check
          %p261 = pneg %p77
        $region46: #{tpu_custom_call.1} parent=39 // pred_check_branch
          %263 = sbr.rel (%p261) target = $region48
        $region47: #{tpu_custom_call.1} parent=39 // pred_region
          %265 = dma.done [#allocation7], 16
        $region48: #{tpu_custom_call.1} parent=39 // pred_fallthru
          _
        %266 = sfence
        %p267 = pneg %p56
        %p268 = pneg %p53
        %p269 = pneg %p77
        %p270 = pneg %p74
        %s271 = smul.u32 2, %s27
        %p272 = scmp.lt.s32.totalorder %s271, 1
        %s273 = scalar_select %p272, %s271, 1
        %p274 = scmp.lt.s32.totalorder %s28, 0
        %s275 = scalar_select %p274, %s28, 0
        %s276 = sadd.s32 %s275, %s273
        %s277 = smul.addr %s276, 4
        %s278 = scalar_lea.vmem %s2, %s277
        %p279 = pneg %p105
        %p280 = pneg %p102
        %p281 = pneg %p126
        %p282 = pneg %p123
        %s283 = smul.u32 2, %s28
        %p284 = scmp.lt.s32.totalorder %s26, 1
        %s285 = scalar_select %p284, %s26, 1
        %p286 = scmp.lt.s32.totalorder %s283, 1
        %s287 = scalar_select %p286, %s283, 1
        %s288 = smul.addr %s285, 6
        %s289 = sadd.s32 %s287, %s288
        %s290 = smul.addr %s289, 4
        %s291 = scalar_lea.vmem %s4, %s290
        %p292 = pneg %p154
        %p293 = pneg %p151
        %p294 = pneg %p182
        %p295 = pneg %p179
        %s296 = sand.u32 %s169, 1
        %s297 = scalar_lea.sflag [#allocation4], %s296
        %s298 = sand.u32 %s169, 1
        %s299 = smul.addr %s298, 48
        %s300 = scalar_lea.vmem [#allocation8], %s299
        %s301 = smul.u32 2, %s27
        %p302 = scmp.lt.s32.totalorder %s301, 1
        %s303 = scalar_select %p302, %s301, 1
        %p304 = scmp.lt.s32.totalorder %s28, 0
        %s305 = scalar_select %p304, %s28, 0
        %s306 = sadd.s32 %s305, %s303
        %s307 = smul.addr %s306, 4
        %s308 = scalar_lea.vmem %s2, %s307
        %s309 = smul.u32 2, %s27
        %s310 = smul.u32 2, %s28
        %p311 = scmp.lt.s32.totalorder %s26, 1
        %s312 = scalar_select %p311, %s26, 1
        %p313 = scmp.lt.s32.totalorder %s310, 1
        %s314 = scalar_select %p313, %s310, 1
        %s315 = smul.addr %s312, 6
        %s316 = sadd.s32 %s314, %s315
        %s317 = smul.addr %s316, 4
        %s318 = scalar_lea.vmem %s4, %s317
        %s319 = smul.u32 2, %s28
        %s320 = smul.u32 2, %s27
        %p322 = scmp.eq.s32.totalorder %s28, 0
        // Predicated region
        $region49: #{tpu_custom_call.1} parent=39 // pred_check
          %p323 = pneg %p322
        $region50: #{tpu_custom_call.1} parent=39 // pred_check_branch
          %325 = sbr.rel (%p323) target = $region52
        $region51: #{tpu_custom_call.1} parent=39 // pred_region
          %vm326 = vcmask 162816
          %327 = vst.msk [vmem:[#allocation2] sm:$0xff] %vm326, 0.0
          %328 = vst.msk [vmem:[#allocation2 + $0x8] sm:$0xff] %vm326, 0.0
          %329 = vst.msk [vmem:[#allocation2 + $0x10] sm:$0xff] %vm326, 0.0
          %330 = vst.msk [vmem:[#allocation2 + $0x18] sm:$0xff] %vm326, 0.0
          %331 = vst.msk [vmem:[#allocation2 + $0x20] sm:$0xff] %vm326, 0.0
          %332 = vst.msk [vmem:[#allocation2 + $0x28] sm:$0xff] %vm326, 0.0
        $region52: #{tpu_custom_call.1} parent=39 // pred_fallthru
          _
        %v333 = vld [vmem:[%s308] sm:$0xf]
        %v334 = vld [vmem:[%s308 + $0x4] sm:$0xf]
        %v335 = vld [vmem:[%s318] sm:$0xf]
        %v336 = vld [vmem:[%s318 + $0x4] sm:$0x1]
        %v337 = vld [vmem:[#allocation2] sm:$0xff]
        %v338 = vld [vmem:[#allocation2 + $0x8] sm:$0xff]
        %v341 = vunpack.c.l.b16 %v333
        %v342 = vunpack.c.l.b16 %v334
        %v343 = vpack.c.b16 %v342, %v341
        %v346 = vunpack.c.l.b16 %v335
        %v347 = vunpack.c.l.b16 %v336
        %v348 = vpack.c.b16 %v347, %v346
        %vm349 = vcmask 80896
        %v351 = vsel %vm349, %v343, 0
        %vm353 = vcmask 1044480
        %v355 = vsel %vm353, %v348, 0
        %357 = vmatpush.bf16.msra.mxu0 0
        %358 = vmatpush.bf16.msra.mxu0 0
        %359 = vmatpush.bf16.msra.mxu0 0
        %360 = vmatpush.bf16.msra.mxu0 0
        %361 = vmatpush.bf16.msra.mxu0 0
        %362 = vmatpush.bf16.msra.mxu0 0
        %363 = vmatpush.bf16.msra.mxu0 0
        %364 = vmatpush.bf16.msra.mxu0 %v355
        %365 = vmatmul.bf16.gmra.mxu0 %v351
        %v366 = vpop.f32.mrf.mxu0
        %v367 = vadd.f32 0.0, %v366
        %v368 = vpop.f32.mrf.mxu0
        %v369 = vadd.f32 0.0, %v368
        %370 = vdwg.mxu0
        %v371 = vadd.f32 %v337, %v367
        %v372 = vadd.f32 %v338, %v369
        %vm373 = vcmask 162816
        %374 = vst.msk [vmem:[#allocation2] sm:$0xff] %vm373, %v371
        %375 = vst.msk [vmem:[#allocation2 + $0x8] sm:$0xff] %vm373, %v372
        %s376 = scalar_lea.vmem %s318, 8
        %v377 = vld [vmem:[%s376] sm:$0xf]
        %v378 = vld [vmem:[%s376 + $0x4] sm:$0x1]
        %v379 = vld [vmem:[#allocation2 + $0x10] sm:$0xff]
        %v380 = vld [vmem:[#allocation2 + $0x18] sm:$0xff]
        %v383 = vunpack.c.l.b16 %v377
        %v384 = vunpack.c.l.b16 %v378
        %v385 = vpack.c.b16 %v384, %v383
        %v387 = vsel %vm353, %v385, 0
        %389 = vmatpush.bf16.msra.mxu0 0
        %390 = vmatpush.bf16.msra.mxu0 0
        %391 = vmatpush.bf16.msra.mxu0 0
        %392 = vmatpush.bf16.msra.mxu0 0
        %393 = vmatpush.bf16.msra.mxu0 0
        %394 = vmatpush.bf16.msra.mxu0 0
        %395 = vmatpush.bf16.msra.mxu0 0
        %396 = vmatpush.bf16.msra.mxu0 %v387
        %397 = vmatmul.bf16.gmra.mxu0 %v351
        %v398 = vpop.f32.mrf.mxu0
        %v399 = vadd.f32 0.0, %v398
        %v400 = vpop.f32.mrf.mxu0
        %v401 = vadd.f32 0.0, %v400
        %402 = vdwg.mxu0
        %v403 = vadd.f32 %v379, %v399
        %v404 = vadd.f32 %v380, %v401
        %405 = vst.msk [vmem:[#allocation2 + $0x10] sm:$0xff] %vm373, %v403
        %406 = vst.msk [vmem:[#allocation2 + $0x18] sm:$0xff] %vm373, %v404
        %s407 = scalar_lea.vmem %s318, 16
        %v408 = vld [vmem:[%s407] sm:$0xf]
        %v409 = vld [vmem:[%s407 + $0x4] sm:$0x1]
        %v410 = vld [vmem:[#allocation2 + $0x20] sm:$0xff]
        %v411 = vld [vmem:[#allocation2 + $0x28] sm:$0xff]
        %v414 = vunpack.c.l.b16 %v408
        %v415 = vunpack.c.l.b16 %v409
        %v416 = vpack.c.b16 %v415, %v414
        %v418 = vsel %vm353, %v416, 0
        %420 = vmatpush.bf16.msra.mxu0 0
        %421 = vmatpush.bf16.msra.mxu0 0
        %422 = vmatpush.bf16.msra.mxu0 0
        %423 = vmatpush.bf16.msra.mxu0 0
        %424 = vmatpush.bf16.msra.mxu0 0
        %425 = vmatpush.bf16.msra.mxu0 0
        %426 = vmatpush.bf16.msra.mxu0 0
        %427 = vmatpush.bf16.msra.mxu0 %v418
        %428 = vmatmul.bf16.gmra.mxu0 %v351
        %v429 = vpop.f32.mrf.mxu0
        %v430 = vadd.f32 0.0, %v429
        %v431 = vpop.f32.mrf.mxu0
        %v432 = vadd.f32 0.0, %v431
        %433 = vdwg.mxu0
        %v434 = vadd.f32 %v410, %v430
        %v435 = vadd.f32 %v411, %v432
        %436 = vst.msk [vmem:[#allocation2 + $0x20] sm:$0xff] %vm373, %v434
        %437 = vst.msk [vmem:[#allocation2 + $0x28] sm:$0xff] %vm373, %v435
        // Predicated region
        $region53: #{tpu_custom_call.1} parent=39 // pred_check
          %p438 = pneg %p322
        $region54: #{tpu_custom_call.1} parent=39 // pred_check_branch
          %440 = sbr.rel (%p438) target = $region56
        $region55: #{tpu_custom_call.1} parent=39 // pred_region
          %v441 = vld [vmem:[#allocation2] sm:$0xff]
          %v442 = vld [vmem:[#allocation2 + $0x8] sm:$0xff]
          %v443 = vld [vmem:[#allocation2 + $0x10] sm:$0xff]
          %v444 = vld [vmem:[#allocation2 + $0x18] sm:$0xff]
          %v445 = vld [vmem:[#allocation2 + $0x20] sm:$0xff]
          %v446 = vld [vmem:[#allocation2 + $0x28] sm:$0xff]
          %v447 = vpack.c.bf16 %v442, %v441
          %v448 = vpack.c.bf16 %v444, %v443
          %v449 = vpack.c.bf16 %v446, %v445
          %v450 = vld [vmem:[%s3] sm:$0xf]
          %v451 = vld [vmem:[%s3 + $0x4] sm:$0xf]
          %v452 = vld [vmem:[%s3 + $0x8] sm:$0x3]
          %v456 = vunpack.c.l.b16 %v450
          %v457 = vunpack.c.l.b16 %v451
          %v458 = vunpack.c.l.b16 %v452
          %v459 = vpack.c.b16 %v457, %v456
          %v460 = vpack.c.b16 %v458, %v458
          %v463 = vsel %vm373, %v447, 0
          %v466 = vsel %vm373, %v448, 0
          %v469 = vsel %vm373, %v449, 0
          %vm471 = vcmask 1041408
          %v473 = vsel %vm471, %v460, 0
          %475 = vmatpush.bf16.msra.mxu0 0
          %476 = vmatpush.bf16.msra.mxu0 0
          %477 = vmatpush.bf16.msra.mxu0 0
          %478 = vmatpush.bf16.msra.mxu0 0
          %479 = vmatpush.bf16.msra.mxu0 0
          %480 = vmatpush.bf16.msra.mxu0 0
          %481 = vmatpush.bf16.msra.mxu0 %v473
          %482 = vmatpush.bf16.msra.mxu0 %v459
          %483 = vmatmul.bf16.gmra.mxu0 %v463
          %v484 = vpop.f32.mrf.mxu0
          %v485 = vadd.f32 0.0, %v484
          %v486 = vpop.f32.mrf.mxu0
          %v487 = vadd.f32 0.0, %v486
          %488 = vmatmul.bf16.gmra.mxu0 %v466
          %v489 = vpop.f32.mrf.mxu0
          %v490 = vadd.f32 0.0, %v489
          %v491 = vpop.f32.mrf.mxu0
          %v492 = vadd.f32 0.0, %v491
          %493 = vmatmul.bf16.gmra.mxu0 %v469
          %v494 = vpop.f32.mrf.mxu0
          %v495 = vadd.f32 0.0, %v494
          %v496 = vpop.f32.mrf.mxu0
          %v497 = vadd.f32 0.0, %v496
          %498 = vdwg.mxu0
          %s499 = sld [smem:[#allocation3]]
          %v500 = vstv %s499
          %v501 = vmul.f32 %v485, %v500
          %v502 = vmul.f32 %v487, %v500
          %s503 = sld [smem:[#allocation6]]
          %v504 = vstv %s503
          %v505 = vadd.f32 %v501, %v504
          %v506 = vadd.f32 %v502, %v504
          %vm507 = vcmask 130048
          %508 = vst.msk [vmem:[%s300] sm:$0xff] %vm507, %v505
          %509 = vst.msk [vmem:[%s300 + $0x8] sm:$0xff] %vm507, %v506
          %s510 = sld [smem:[#allocation3 + $0x1]]
          %v511 = vstv %s510
          %v512 = vmul.f32 %v490, %v511
          %v513 = vmul.f32 %v492, %v511
          %s514 = sld [smem:[#allocation6 + $0x1]]
          %v515 = vstv %s514
          %v516 = vadd.f32 %v512, %v515
          %v517 = vadd.f32 %v513, %v515
          %s518 = scalar_lea.vmem %s300, 16 [#allocation8]
          %519 = vst.msk [vmem:[%s518] sm:$0xff] %vm507, %v516
          %520 = vst.msk [vmem:[%s518 + $0x8] sm:$0xff] %vm507, %v517
          %s521 = sld [smem:[#allocation3 + $0x2]]
          %v522 = vstv %s521
          %v523 = vmul.f32 %v495, %v522
          %v524 = vmul.f32 %v497, %v522
          %s525 = sld [smem:[#allocation6 + $0x2]]
          %v526 = vstv %s525
          %v527 = vadd.f32 %v523, %v526
          %v528 = vadd.f32 %v524, %v526
          %s529 = scalar_lea.vmem %s300, 32 [#allocation8]
          %530 = vst.msk [vmem:[%s529] sm:$0xff] %vm507, %v527
          %531 = vst.msk [vmem:[%s529 + $0x8] sm:$0xff] %vm507, %v528
        $region56: #{tpu_custom_call.1} parent=39 // pred_fallthru
          _
        %s532 = sand.u32 %s169, 1
        %s533 = scalar_lea.sflag [#allocation4], %s532
        %s534 = sand.u32 %s169, 1
        %s535 = smul.addr %s534, 48
        %s536 = scalar_lea.vmem [#allocation8], %s535
        // Predicated region
        $region57: #{tpu_custom_call.1} parent=39 // pred_check
          %p537 = pneg %p179
        $region58: #{tpu_custom_call.1} parent=39 // pred_check_branch
          %539 = sbr.rel (%p537) target = $region60
        $region59: #{tpu_custom_call.1} parent=39 // pred_region
          %s540 = smul.u32 2, %s27
          %542 = vsyncadd %s533, 0
          %s543 = smul.addr %s26, 6
          %s544 = sadd.s32 %s540, %s543
          %s545 = smul.addr %s544, 8
          %s546 = scalar_lea.hbm %s5, %s545
          %s547 = sshll.u32 %s536, 4
          %s548 = int_to_ptr.vmem [resolvable:$true] %s547
          %s549 = sshll.u32 %s546, 4
          %s550 = int_to_ptr.hbm [resolvable:$true] %s549
          %555 = dma.vmem_to_hbm [thread:$0]  %s548, 768, %s550, %s533, 128, 128, 8
        $region60: #{tpu_custom_call.1} parent=39 // pred_fallthru
          _
      $region40: #{tpu_custom_call.1} parent=5 // pred_fallthru
        _
      %p556 = scmp.le.s32.totalorder 2, %s16
      // Predicated region
      $region61: #{tpu_custom_call.1} parent=5 // pred_check
        %p557 = pneg %p556
      $region62: #{tpu_custom_call.1} parent=5 // pred_check_branch
        %559 = sbr.rel (%p557) target = $region64
      $region63: #{tpu_custom_call.1} parent=5 // pred_region
        %s560 = ssub.s32 %s16, 2
        // Predicated region
        $region65: #{tpu_custom_call.1} parent=63 // pred_check
          %p561 = pneg %p185
        $region66: #{tpu_custom_call.1} parent=63 // pred_check_branch
          %563 = sbr.rel (%p561) target = $region68
        $region67: #{tpu_custom_call.1} parent=63 // pred_region
          %s564 = sand.u32 %s170, 1
          %s565 = scalar_lea.sflag [#allocation4], %s564
          %s566 = sand.u32 %s170, 1
          %s567 = smul.addr %s566, 48
          %s568 = scalar_lea.vmem [#allocation8], %s567
          %570 = dma.done %s565, 768
        $region68: #{tpu_custom_call.1} parent=63 // pred_fallthru
          _
      $region64: #{tpu_custom_call.1} parent=5 // pred_fallthru
        _
    $region6: #{tpu_custom_call.1} parent=1 // loop_footer
      %s20 = sadd.s32 1, %s16
    $region7: #{tpu_custom_call.1} parent=1 // loop_footer_branch
      %15 = sbr.rel target = $region3
    $region8: #{tpu_custom_call.1} parent=1 // loop_exit
      _
    %571 = vsyncpa [#allocation4], 1
    %s572 = scalar_lea.sflag [#allocation4], 1
    %573 = vsyncpa %s572, 1
    %574 = vsyncpa [#allocation5], 1
    %s575 = scalar_lea.sflag [#allocation5], 1
    %576 = vsyncpa %s575, 1
    %577 = vsyncpa [#allocation7], 1

// kernel: tpu_custom_call.1
$region0: #{tpu_custom_call.1}
  #allocation0 [shape = 'u32[]', space=smem, size = 0x4, offset = 0x4, fixed_abs, tag = 'smem constant byte address 0x4 - core index']
  #allocation1 [shape = 'u32[72,128]{1,0:T(1,128)}', space=vmem, size = 0x9000, scoped, tag = 'internal scratch']
  #allocation2 [shape = 'f32[48,20]{1,0:T(8,128)}', space=vmem, size = 0x6000, scoped, tag = 'scratch operand']
  %s0 = inlined_call_operand.vmem [shape: f32[3], index: 0, kind: input, shape index: {}]
  %s1 = inlined_call_operand.vmem [shape: f32[3], index: 1, kind: input, shape index: {}]
  %s2 = inlined_call_operand.vmem [shape: bf16[16,10], index: 2, kind: input, shape index: {}]
  %s3 = inlined_call_operand.vmem [shape: bf16[20,16], index: 3, kind: input, shape index: {}]
  %s4 = inlined_call_operand.vmem [shape: bf16[2,3,10,20], index: 4, kind: input, shape index: {}]
  %s5 = inlined_call_operand.hbm [shape: f32[2,3,16,16], index: 5, kind: output, shape index: {}]
  %s6 = sld [smem:[#allocation0]]
  $region69: #{tpu_custom_call.1} parent=0
    _
  %s8 = ssub.s32 1, %s6
  %s9 = scalar_select 0, %s8, %s6
  $region1: #{tpu_custom_call.1} parent=0
    #allocation3 [shape = 'u8[512]{0}', space=smem, size = 0x200, scoped, tag = 'input window, operand 0, single buffered']
    #allocation4 [shape = 's32[2]{0}', space=sflag, size = 0x8, scoped, tag = 'scoped memory for tpu_custom_call.1']
    #allocation5 [shape = 's32[2]{0}', space=sflag, size = 0x8, scoped, tag = 'scoped memory for tpu_custom_call.1']
    #allocation6 [shape = 'u8[512]{0}', space=smem, size = 0x200, scoped, tag = 'input window, operand 1, single buffered']
    #allocation7 [shape = 's32[1]{0}', space=sflag, size = 0x4, scoped, tag = 'scoped memory for tpu_custom_call.1']
    #allocation8 [shape = 'u8[49152]{0}', space=vmem, size = 0xc000, scoped, tag = 'output window, operand 0']
    %10 = vsyncpa [#allocation5], 0
    %11 = vsyncpa [#allocation7], 0
    %12 = vsyncpa [#allocation4], 0
    %s13 = scalar_lea.sflag [#allocation4], 1
    %14 = vsyncpa %s13, 0
    loop: start=0, step=1, limit=4
    $region2: #{tpu_custom_call.1} parent=1 // loop_pre_header
      _
    $region3: #{tpu_custom_call.1} parent=1 // loop_header
      %s16 = sphi 0, %s20
      %p17 = scmp.ge.s32.totalorder %s16, 4
      %s23 = sphi 0, %s42
      %s24 = sphi 0, %s38
      %s25 = sphi 0, %s34
      %s26 = sphi 0, %s23
      %s27 = sphi 0, %s24
      %s28 = sphi 0, %s25
      %s29 = sphi 0, %s26
      %s30 = sphi 0, %s27
      %s31 = sphi 0, %s28
      %s43 = sphi 0, %s43
      %s45 = sphi 0, %s43
      %s46 = sphi 0, %s45
      %s60 = sphi 0, %s46
      %s64 = sphi 0, %s64
      %s66 = sphi 0, %s64
      %s67 = sphi 0, %s66
      %s81 = sphi 0, %s67
      %s89 = sphi 0, %s91
      %s92 = sphi 0, %s89
      %s93 = sphi 0, %s92
      %s109 = sphi 0, %s93
      %s113 = sphi 0, %s113
      %s115 = sphi 0, %s113
      %s116 = sphi 0, %s115
      %s130 = sphi 0, %s116
      %s138 = sphi 0, %s140
      %s141 = sphi 0, %s138
      %s142 = sphi 0, %s141
      %s158 = sphi 0, %s142
      %s166 = sphi 0, %s168
      %s169 = sphi 0, %s166
      %s170 = sphi 0, %s169
      %s186 = sphi 0, %s170
    $region4: #{tpu_custom_call.1} parent=1 // loop_header_branch
      %19 = sbr.rel (%p17) target = $region8
    $region5: #{tpu_custom_call.1} parent=1 // loop_body
      %s21 = ssub.s32 %s16, 1
      %s22 = ssub.s32 %s16, 2
      %s32 = sadd.s32 1, %s25
      %p33 = scmp.ge.s32.totalorder %s32, 1
      %s34 = scalar_select %p33, 0, %s32
      %s35 = sadd.s32 1, %s24
      %s36 = scalar_select %p33, %s35, %s24
      %p37 = scmp.ge.s32.totalorder %s36, 1
      %s38 = scalar_select %p37, 0, %s36
      %s39 = sadd.s32 1, %s23
      %s40 = scalar_select %p37, %s39, %s23
      %p41 = scmp.ge.s32.totalorder %s40, 2
      %s42 = scalar_select %p41, 0, %s40
      %s44 = sadd.s32 %s43, 1
      %p47 = scmp.eq.s32.totalorder %s16, 1
      %p48 = scmp.ne.s32.totalorder %s43, %s45
      %p49 = scmp.eq.s32.totalorder %s16, 0
      %p50 = por %p48, %p49
      %p51 = scmp.ne.s32.totalorder %s43, %s45
      %p52 = scmp.eq.s32.totalorder %s21, 1
      %p53 = por %p51, %p52
      %p54 = scmp.ne.s32.totalorder %s45, %s46
      %p55 = scmp.eq.s32.totalorder %s21, 0
      %p56 = por %p54, %p55
      %p57 = scmp.ne.s32.totalorder %s45, %s46
      %p58 = scmp.eq.s32.totalorder %s22, 1
      %p59 = por %p57, %p58
      %p61 = scmp.ne.s32.totalorder %s46, %s60
      %p62 = scmp.eq.s32.totalorder %s22, 0
      %p63 = por %p61, %p62
      %s65 = sadd.s32 %s64, 1
      %p68 = scmp.eq.s32.totalorder %s16, 1
      %p69 = scmp.ne.s32.totalorder %s64, %s66
      %p70 = scmp.eq.s32.totalorder %s16, 0
      %p71 = por %p69, %p70
      %p72 = scmp.ne.s32.totalorder %s64, %s66
      %p73 = scmp.eq.s32.totalorder %s21, 1
      %p74 = por %p72, %p73
      %p75 = scmp.ne.s32.totalorder %s66, %s67
      %p76 = scmp.eq.s32.totalorder %s21, 0
      %p77 = por %p75, %p76
      %p78 = scmp.ne.s32.totalorder %s66, %s67
      %p79 = scmp.eq.s32.totalorder %s22, 1
      %p80 = por %p78, %p79
      %p82 = scmp.ne.s32.totalorder %s67, %s81
      %p83 = scmp.eq.s32.totalorder %s22, 0
      %p84 = por %p82, %p83
      %s85 = ssub.s32 %s24, %s38
      %s86 = ssub.s32 %s25, %s34
      %s87 = sor.u32 %s85, %s86
      %p88 = scmp.eq.s32.totalorder %s87, 0
      %s90 = sadd.s32 %s89, 1
      %s91 = scalar_select %p88, %s89, %s90
      %p94 = pneg %p88
      %p95 = scmp.eq.s32.totalorder %s16, 1
      %p96 = por %p94, %p95
      %p97 = scmp.ne.s32.totalorder %s89, %s92
      %p98 = scmp.eq.s32.totalorder %s16, 0
      %p99 = por %p97, %p98
      %p100 = scmp.ne.s32.totalorder %s89, %s92
      %p101 = scmp.eq.s32.totalorder %s21, 1
      %p102 = por %p100, %p101
      %p103 = scmp.ne.s32.totalorder %s92, %s93
      %p104 = scmp.eq.s32.totalorder %s21, 0
      %p105 = por %p103, %p104
      %p106 = scmp.ne.s32.totalorder %s92, %s93
      %p107 = scmp.eq.s32.totalorder %s22, 1
      %p108 = por %p106, %p107
      %p110 = scmp.ne.s32.totalorder %s93, %s109
      %p111 = scmp.eq.s32.totalorder %s22, 0
      %p112 = por %p110, %p111
      %s114 = sadd.s32 %s113, 1
      %p117 = scmp.eq.s32.totalorder %s16, 1
      %p118 = scmp.ne.s32.totalorder %s113, %s115
      %p119 = scmp.eq.s32.totalorder %s16, 0
      %p120 = por %p118, %p119
      %p121 = scmp.ne.s32.totalorder %s113, %s115
      %p122 = scmp.eq.s32.totalorder %s21, 1
      %p123 = por %p121, %p122
      %p124 = scmp.ne.s32.totalorder %s115, %s116
      %p125 = scmp.eq.s32.totalorder %s21, 0
      %p126 = por %p124, %p125
      %p127 = scmp.ne.s32.totalorder %s115, %s116
      %p128 = scmp.eq.s32.totalorder %s22, 1
      %p129 = por %p127, %p128
      %p131 = scmp.ne.s32.totalorder %s116, %s130
      %p132 = scmp.eq.s32.totalorder %s22, 0
      %p133 = por %p131, %p132
      %s134 = ssub.s32 %s23, %s42
      %s135 = ssub.s32 %s25, %s34
      %s136 = sor.u32 %s134, %s135
      %p137 = scmp.eq.s32.totalorder %s136, 0
      %s139 = sadd.s32 %s138, 1
      %s140 = scalar_select %p137, %s138, %s139
      %p143 = pneg %p137
      %p144 = scmp.eq.s32.totalorder %s16, 1
      %p145 = por %p143, %p144
      %p146 = scmp.ne.s32.totalorder %s138, %s141
      %p147 = scmp.eq.s32.totalorder %s16, 0
      %p148 = por %p146, %p147
      %p149 = scmp.ne.s32.totalorder %s138, %s141
      %p150 = scmp.eq.s32.totalorder %s21, 1
      %p151 = por %p149, %p150
      %p152 = scmp.ne.s32.totalorder %s141, %s142
      %p153 = scmp.eq.s32.totalorder %s21, 0
      %p154 = por %p152, %p153
      %p155 = scmp.ne.s32.totalorder %s141, %s142
      %p156 = scmp.eq.s32.totalorder %s22, 1
      %p157 = por %p155, %p156
      %p159 = scmp.ne.s32.totalorder %s142, %s158
      %p160 = scmp.eq.s32.totalorder %s22, 0
      %p161 = por %p159, %p160
      %s162 = ssub.s32 %s23, %s42
      %s163 = ssub.s32 %s24, %s38
      %s164 = sor.u32 %s162, %s163
      %p165 = scmp.eq.s32.totalorder %s164, 0
      %s167 = sadd.s32 %s166, 1
      %s168 = scalar_select %p165, %s166, %s167
      %p171 = pneg %p165
      %p172 = scmp.eq.s32.totalorder %s16, 1
      %p173 = por %p171, %p172
      %p174 = scmp.ne.s32.totalorder %s166, %s169
      %p175 = scmp.eq.s32.totalorder %s16, 0
      %p176 = por %p174, %p175
      %p177 = scmp.ne.s32.totalorder %s166, %s169
      %p178 = scmp.eq.s32.totalorder %s21, 1
      %p179 = por %p177, %p178
      %p180 = scmp.ne.s32.totalorder %s169, %s170
      %p181 = scmp.eq.s32.totalorder %s21, 0
      %p182 = por %p180, %p181
      %p183 = scmp.ne.s32.totalorder %s169, %s170
      %p184 = scmp.eq.s32.totalorder %s22, 1
      %p185 = por %p183, %p184
      %p187 = scmp.ne.s32.totalorder %s170, %s186
      %p188 = scmp.eq.s32.totalorder %s22, 0
      %p189 = por %p187, %p188
      %p190 = scmp.le.s32.totalorder 1, %s16
      %p191 = scmp.lt.s32.totalorder %s16, 3
      %p192 = pnand %p190, %p191
      %p193 = pneg %p192
      // Predicated region
      $region9: #{tpu_custom_call.1} parent=5 // pred_check
        _
      $region10: #{tpu_custom_call.1} parent=5 // pred_check_branch
        %195 = sbr.rel (%p192) target = $region12
      $region11: #{tpu_custom_call.1} parent=5 // pred_region
        %s196 = ssub.s32 %s16, 1
        // Predicated region
        $region13: #{tpu_custom_call.1} parent=11 // pred_check
          %p197 = pneg %p56
        $region14: #{tpu_custom_call.1} parent=11 // pred_check_branch
          %199 = sbr.rel (%p197) target = $region16
        $region15: #{tpu_custom_call.1} parent=11 // pred_region
          %201 = vsyncadd [#allocation5], 0
          %s203 = sshll.u32 %s0, 4
          %s204 = int_to_ptr.vmem [resolvable:$true] %s203
          %206 = dma.vmem_to_smem %s204, 16, [#allocation3], [#allocation5]
        $region16: #{tpu_custom_call.1} parent=11 // pred_fallthru
          _
        // Predicated region
        $region17: #{tpu_custom_call.1} parent=11 // pred_check
          %p207 = pneg %p77
        $region18: #{tpu_custom_call.1} parent=11 // pred_check_branch
          %209 = sbr.rel (%p207) target = $region20
        $region19: #{tpu_custom_call.1} parent=11 // pred_region
          %211 = vsyncadd [#allocation7], 0
          %s213 = sshll.u32 %s1, 4
          %s214 = int_to_ptr.vmem [resolvable:$true] %s213
          %216 = dma.vmem_to_smem %s214, 16, [#allocation6], [#allocation7]
        $region20: #{tpu_custom_call.1} parent=11 // pred_fallthru
          _
        // Predicated region
        $region21: #{tpu_custom_call.1} parent=11 // pred_check
          %p217 = pneg %p105
        $region22: #{tpu_custom_call.1} parent=11 // pred_check_branch
          %219 = sbr.rel (%p217) target = $region24
        $region23: #{tpu_custom_call.1} parent=11 // pred_region
          %s220 = smul.u32 2, %s27
          %p221 = scmp.lt.s32.totalorder %s220, 1
          %s222 = scalar_select %p221, %s220, 1
          %p223 = scmp.lt.s32.totalorder %s28, 0
          %s224 = scalar_select %p223, %s28, 0
          %s225 = sadd.s32 %s224, %s222
          %s226 = smul.addr %s225, 4
          %s227 = scalar_lea.vmem %s2, %s226
          %s228 = smul.u32 2, %s27
        $region24: #{tpu_custom_call.1} parent=11 // pred_fallthru
          _
        // Predicated region
        $region25: #{tpu_custom_call.1} parent=11 // pred_check
          %p229 = pneg %p126
        $region26: #{tpu_custom_call.1} parent=11 // pred_check_branch
          %231 = sbr.rel (%p229) target = $region28
        $region27: #{tpu_custom_call.1} parent=11 // pred_region
          _
        $region28: #{tpu_custom_call.1} parent=11 // pred_fallthru
          _
      $region12: #{tpu_custom_call.1} parent=5 // pred_fallthru
        _
      %p232 = scmp.lt.s32.totalorder %s16, 2
      // Predicated region
      $region29: #{tpu_custom_call.1} parent=5 // pred_check
        %p233 = pneg %p232
      $region30: #{tpu_custom_call.1} parent=5 // pred_check_branch
        %235 = sbr.rel (%p233) target = $region32
      $region31: #{tpu_custom_call.1} parent=5 // pred_region
        // Predicated region
        $region33: #{tpu_custom_call.1} parent=31 // pred_check
          %p236 = pneg %p148
        $region34: #{tpu_custom_call.1} parent=31 // pred_check_branch
          %238 = sbr.rel (%p236) target = $region36
        $region35: #{tpu_custom_call.1} parent=31 // pred_region
          %s239 = smul.u32 2, %s25
          %p240 = scmp.lt.s32.totalorder %s23, 1
          %s241 = scalar_select %p240, %s23, 1
          %p242 = scmp.lt.s32.totalorder %s239, 1
          %s243 = scalar_select %p242, %s239, 1
          %s244 = smul.addr %s241, 6
          %s245 = sadd.s32 %s243, %s244
          %s246 = smul.addr %s245, 4
          %s247 = scalar_lea.vmem %s4, %s246
          %s248 = smul.u32 2, %s25
        $region36: #{tpu_custom_call.1} parent=31 // pred_fallthru
          _
      $region32: #{tpu_custom_call.1} parent=5 // pred_fallthru
        _
      %p249 = scmp.le.s32.totalorder 1, %s16
      %p250 = scmp.lt.s32.totalorder %s16, 3
      %p251 = pnand %p249, %p250
      %p252 = pneg %p251
      // Predicated region
      $region37: #{tpu_custom_call.1} parent=5 // pred_check
        _
      $region38: #{tpu_custom_call.1} parent=5 // pred_check_branch
        %254 = sbr.rel (%p251) target = $region40
      $region39: #{tpu_custom_call.1} parent=5 // pred_region
        %s255 = ssub.s32 %s16, 1
        // Predicated region
        $region41: #{tpu_custom_call.1} parent=39 // pred_check
          %p256 = pneg %p56
        $region42: #{tpu_custom_call.1} parent=39 // pred_check_branch
          %258 = sbr.rel (%p256) target = $region44
        $region43: #{tpu_custom_call.1} parent=39 // pred_region
          %260 = dma.done [#allocation5], 16
        $region44: #{tpu_custom_call.1} parent=39 // pred_fallthru
          _
        // Predicated region
        $region45: #{tpu_custom_call.1} parent=39 // pred_check
          %p261 = pneg %p77
        $region46: #{tpu_custom_call.1} parent=39 // pred_check_branch
          %263 = sbr.rel (%p261) target = $region48
        $region47: #{tpu_custom_call.1} parent=39 // pred_region
          %265 = dma.done [#allocation7], 16
        $region48: #{tpu_custom_call.1} parent=39 // pred_fallthru
          _
        %266 = sfence
        %p267 = pneg %p56
        %p268 = pneg %p53
        %p269 = pneg %p77
        %p270 = pneg %p74
        %s271 = smul.u32 2, %s27
        %p272 = scmp.lt.s32.totalorder %s271, 1
        %s273 = scalar_select %p272, %s271, 1
        %p274 = scmp.lt.s32.totalorder %s28, 0
        %s275 = scalar_select %p274, %s28, 0
        %s276 = sadd.s32 %s275, %s273
        %s277 = smul.addr %s276, 4
        %s278 = scalar_lea.vmem %s2, %s277
        %p279 = pneg %p105
        %p280 = pneg %p102
        %p281 = pneg %p126
        %p282 = pneg %p123
        %s283 = smul.u32 2, %s28
        %p284 = scmp.lt.s32.totalorder %s26, 1
        %s285 = scalar_select %p284, %s26, 1
        %p286 = scmp.lt.s32.totalorder %s283, 1
        %s287 = scalar_select %p286, %s283, 1
        %s288 = smul.addr %s285, 6
        %s289 = sadd.s32 %s287, %s288
        %s290 = smul.addr %s289, 4
        %s291 = scalar_lea.vmem %s4, %s290
        %p292 = pneg %p154
        %p293 = pneg %p151
        %p294 = pneg %p182
        %p295 = pneg %p179
        %s296 = sand.u32 %s169, 1
        %s297 = scalar_lea.sflag [#allocation4], %s296
        %s298 = sand.u32 %s169, 1
        %s299 = smul.addr %s298, 48
        %s300 = scalar_lea.vmem [#allocation8], %s299
        %s301 = smul.u32 2, %s27
        %p302 = scmp.lt.s32.totalorder %s301, 1
        %s303 = scalar_select %p302, %s301, 1
        %p304 = scmp.lt.s32.totalorder %s28, 0
        %s305 = scalar_select %p304, %s28, 0
        %s306 = sadd.s32 %s305, %s303
        %s307 = smul.addr %s306, 4
        %s308 = scalar_lea.vmem %s2, %s307
        %s309 = smul.u32 2, %s27
        %s310 = smul.u32 2, %s28
        %p311 = scmp.lt.s32.totalorder %s26, 1
        %s312 = scalar_select %p311, %s26, 1
        %p313 = scmp.lt.s32.totalorder %s310, 1
        %s314 = scalar_select %p313, %s310, 1
        %s315 = smul.addr %s312, 6
        %s316 = sadd.s32 %s314, %s315
        %s317 = smul.addr %s316, 4
        %s318 = scalar_lea.vmem %s4, %s317
        %s319 = smul.u32 2, %s28
        %s320 = smul.u32 2, %s27
        %p322 = scmp.eq.s32.totalorder %s28, 0
        // Predicated region
        $region49: #{tpu_custom_call.1} parent=39 // pred_check
          %p323 = pneg %p322
        $region50: #{tpu_custom_call.1} parent=39 // pred_check_branch
          %325 = sbr.rel (%p323) target = $region52
        $region51: #{tpu_custom_call.1} parent=39 // pred_region
          %vm326 = vcmask 162816
          %327 = vst.msk [vmem:[#allocation2] sm:$0xff] %vm326, 0.0
          %328 = vst.msk [vmem:[#allocation2 + $0x8] sm:$0xff] %vm326, 0.0
          %329 = vst.msk [vmem:[#allocation2 + $0x10] sm:$0xff] %vm326, 0.0
          %330 = vst.msk [vmem:[#allocation2 + $0x18] sm:$0xff] %vm326, 0.0
          %331 = vst.msk [vmem:[#allocation2 + $0x20] sm:$0xff] %vm326, 0.0
          %332 = vst.msk [vmem:[#allocation2 + $0x28] sm:$0xff] %vm326, 0.0
        $region52: #{tpu_custom_call.1} parent=39 // pred_fallthru
          _
        %v333 = vld [vmem:[%s308] sm:$0xf]
        %v334 = vld [vmem:[%s308 + $0x4] sm:$0xf]
        %v335 = vld [vmem:[%s318] sm:$0xf]
        %v336 = vld [vmem:[%s318 + $0x4] sm:$0x1]
        %v337 = vld [vmem:[#allocation2] sm:$0xff]
        %v338 = vld [vmem:[#allocation2 + $0x8] sm:$0xff]
        %v341 = vunpack.c.l.b16 %v333
        %v342 = vunpack.c.l.b16 %v334
        %v343 = vpack.c.b16 %v342, %v341
        %v346 = vunpack.c.l.b16 %v335
        %v347 = vunpack.c.l.b16 %v336
        %v348 = vpack.c.b16 %v347, %v346
        %vm349 = vcmask 80896
        %v351 = vsel %vm349, %v343, 0
        %vm353 = vcmask 1044480
        %v355 = vsel %vm353, %v348, 0
        %357 = vmatpush.bf16.msra.mxu0 0
        %358 = vmatpush.bf16.msra.mxu0 0
        %359 = vmatpush.bf16.msra.mxu0 0
        %360 = vmatpush.bf16.msra.mxu0 0
        %361 = vmatpush.bf16.msra.mxu0 0
        %362 = vmatpush.bf16.msra.mxu0 0
        %363 = vmatpush.bf16.msra.mxu0 0
        %364 = vmatpush.bf16.msra.mxu0 %v355
        %365 = vmatmul.bf16.gmra.mxu0 %v351
        %v366 = vpop.f32.mrf.mxu0
        %v367 = vadd.f32 0.0, %v366
        %v368 = vpop.f32.mrf.mxu0
        %v369 = vadd.f32 0.0, %v368
        %370 = vdwg.mxu0
        %v371 = vadd.f32 %v337, %v367
        %v372 = vadd.f32 %v338, %v369
        %vm373 = vcmask 162816
        %374 = vst.msk [vmem:[#allocation2] sm:$0xff] %vm373, %v371
        %375 = vst.msk [vmem:[#allocation2 + $0x8] sm:$0xff] %vm373, %v372
        %s376 = scalar_lea.vmem %s318, 8
        %v377 = vld [vmem:[%s376] sm:$0xf]
        %v378 = vld [vmem:[%s376 + $0x4] sm:$0x1]
        %v379 = vld [vmem:[#allocation2 + $0x10] sm:$0xff]
        %v380 = vld [vmem:[#allocation2 + $0x18] sm:$0xff]
        %v383 = vunpack.c.l.b16 %v377
        %v384 = vunpack.c.l.b16 %v378
        %v385 = vpack.c.b16 %v384, %v383
        %v387 = vsel %vm353, %v385, 0
        %389 = vmatpush.bf16.msra.mxu0 0
        %390 = vmatpush.bf16.msra.mxu0 0
        %391 = vmatpush.bf16.msra.mxu0 0
        %392 = vmatpush.bf16.msra.mxu0 0
        %393 = vmatpush.bf16.msra.mxu0 0
        %394 = vmatpush.bf16.msra.mxu0 0
        %395 = vmatpush.bf16.msra.mxu0 0
        %396 = vmatpush.bf16.msra.mxu0 %v387
        %397 = vmatmul.bf16.gmra.mxu0 %v351
        %v398 = vpop.f32.mrf.mxu0
        %v399 = vadd.f32 0.0, %v398
        %v400 = vpop.f32.mrf.mxu0
        %v401 = vadd.f32 0.0, %v400
        %402 = vdwg.mxu0
        %v403 = vadd.f32 %v379, %v399
        %v404 = vadd.f32 %v380, %v401
        %405 = vst.msk [vmem:[#allocation2 + $0x10] sm:$0xff] %vm373, %v403
        %406 = vst.msk [vmem:[#allocation2 + $0x18] sm:$0xff] %vm373, %v404
        %s407 = scalar_lea.vmem %s318, 16
        %v408 = vld [vmem:[%s407] sm:$0xf]
        %v409 = vld [vmem:[%s407 + $0x4] sm:$0x1]
        %v410 = vld [vmem:[#allocation2 + $0x20] sm:$0xff]
        %v411 = vld [vmem:[#allocation2 + $0x28] sm:$0xff]
        %v414 = vunpack.c.l.b16 %v408
        %v415 = vunpack.c.l.b16 %v409
        %v416 = vpack.c.b16 %v415, %v414
        %v418 = vsel %vm353, %v416, 0
        %420 = vmatpush.bf16.msra.mxu0 0
        %421 = vmatpush.bf16.msra.mxu0 0
        %422 = vmatpush.bf16.msra.mxu0 0
        %423 = vmatpush.bf16.msra.mxu0 0
        %424 = vmatpush.bf16.msra.mxu0 0
        %425 = vmatpush.bf16.msra.mxu0 0
        %426 = vmatpush.bf16.msra.mxu0 0
        %427 = vmatpush.bf16.msra.mxu0 %v418
        %428 = vmatmul.bf16.gmra.mxu0 %v351
        %v429 = vpop.f32.mrf.mxu0
        %v430 = vadd.f32 0.0, %v429
        %v431 = vpop.f32.mrf.mxu0
        %v432 = vadd.f32 0.0, %v431
        %433 = vdwg.mxu0
        %v434 = vadd.f32 %v410, %v430
        %v435 = vadd.f32 %v411, %v432
        %436 = vst.msk [vmem:[#allocation2 + $0x20] sm:$0xff] %vm373, %v434
        %437 = vst.msk [vmem:[#allocation2 + $0x28] sm:$0xff] %vm373, %v435
        // Predicated region
        $region53: #{tpu_custom_call.1} parent=39 // pred_check
          %p438 = pneg %p322
        $region54: #{tpu_custom_call.1} parent=39 // pred_check_branch
          %440 = sbr.rel (%p438) target = $region56
        $region55: #{tpu_custom_call.1} parent=39 // pred_region
          %v441 = vld [vmem:[#allocation2] sm:$0xff]
          %v442 = vld [vmem:[#allocation2 + $0x8] sm:$0xff]
          %v443 = vld [vmem:[#allocation2 + $0x10] sm:$0xff]
          %v444 = vld [vmem:[#allocation2 + $0x18] sm:$0xff]
          %v445 = vld [vmem:[#allocation2 + $0x20] sm:$0xff]
          %v446 = vld [vmem:[#allocation2 + $0x28] sm:$0xff]
          %v447 = vpack.c.bf16 %v442, %v441
          %v448 = vpack.c.bf16 %v444, %v443
          %v449 = vpack.c.bf16 %v446, %v445
          %v450 = vld [vmem:[%s3] sm:$0xf]
          %v451 = vld [vmem:[%s3 + $0x4] sm:$0xf]
          %v452 = vld [vmem:[%s3 + $0x8] sm:$0x3]
          %v456 = vunpack.c.l.b16 %v450
          %v457 = vunpack.c.l.b16 %v451
          %v458 = vunpack.c.l.b16 %v452
          %v459 = vpack.c.b16 %v457, %v456
          %v460 = vpack.c.b16 %v458, %v458
          %v463 = vsel %vm373, %v447, 0
          %v466 = vsel %vm373, %v448, 0
          %v469 = vsel %vm373, %v449, 0
          %vm471 = vcmask 1041408
          %v473 = vsel %vm471, %v460, 0
          %475 = vmatpush.bf16.msra.mxu0 0
          %476 = vmatpush.bf16.msra.mxu0 0
          %477 = vmatpush.bf16.msra.mxu0 0
          %478 = vmatpush.bf16.msra.mxu0 0
          %479 = vmatpush.bf16.msra.mxu0 0
          %480 = vmatpush.bf16.msra.mxu0 0
          %481 = vmatpush.bf16.msra.mxu0 %v473
          %482 = vmatpush.bf16.msra.mxu0 %v459
          %483 = vmatmul.bf16.gmra.mxu0 %v463
          %v484 = vpop.f32.mrf.mxu0
          %v485 = vadd.f32 0.0, %v484
          %v486 = vpop.f32.mrf.mxu0
          %v487 = vadd.f32 0.0, %v486
          %488 = vmatmul.bf16.gmra.mxu0 %v466
          %v489 = vpop.f32.mrf.mxu0
          %v490 = vadd.f32 0.0, %v489
          %v491 = vpop.f32.mrf.mxu0
          %v492 = vadd.f32 0.0, %v491
          %493 = vmatmul.bf16.gmra.mxu0 %v469
          %v494 = vpop.f32.mrf.mxu0
          %v495 = vadd.f32 0.0, %v494
          %v496 = vpop.f32.mrf.mxu0
          %v497 = vadd.f32 0.0, %v496
          %498 = vdwg.mxu0
          %s499 = sld [smem:[#allocation3]]
          %v500 = vstv %s499
          %v501 = vmul.f32 %v485, %v500
          %v502 = vmul.f32 %v487, %v500
          %s503 = sld [smem:[#allocation6]]
          %v504 = vstv %s503
          %v505 = vadd.f32 %v501, %v504
          %v506 = vadd.f32 %v502, %v504
          %vm507 = vcmask 130048
          %508 = vst.msk [vmem:[%s300] sm:$0xff] %vm507, %v505
          %509 = vst.msk [vmem:[%s300 + $0x8] sm:$0xff] %vm507, %v506
          %s510 = sld [smem:[#allocation3 + $0x1]]
          %v511 = vstv %s510
          %v512 = vmul.f32 %v490, %v511
          %v513 = vmul.f32 %v492, %v511
          %s514 = sld [smem:[#allocation6 + $0x1]]
          %v515 = vstv %s514
          %v516 = vadd.f32 %v512, %v515
          %v517 = vadd.f32 %v513, %v515
          %s518 = scalar_lea.vmem %s300, 16 [#allocation8]
          %519 = vst.msk [vmem:[%s518] sm:$0xff] %vm507, %v516
          %520 = vst.msk [vmem:[%s518 + $0x8] sm:$0xff] %vm507, %v517
          %s521 = sld [smem:[#allocation3 + $0x2]]
          %v522 = vstv %s521
          %v523 = vmul.f32 %v495, %v522
          %v524 = vmul.f32 %v497, %v522
          %s525 = sld [smem:[#allocation6 + $0x2]]
          %v526 = vstv %s525
          %v527 = vadd.f32 %v523, %v526
          %v528 = vadd.f32 %v524, %v526
          %s529 = scalar_lea.vmem %s300, 32 [#allocation8]
          %530 = vst.msk [vmem:[%s529] sm:$0xff] %vm507, %v527
          %531 = vst.msk [vmem:[%s529 + $0x8] sm:$0xff] %vm507, %v528
        $region56: #{tpu_custom_call.1} parent=39 // pred_fallthru
          _
        %s532 = sand.u32 %s169, 1
        %s533 = scalar_lea.sflag [#allocation4], %s532
        %s534 = sand.u32 %s169, 1
        %s535 = smul.addr %s534, 48
        %s536 = scalar_lea.vmem [#allocation8], %s535
        // Predicated region
        $region57: #{tpu_custom_call.1} parent=39 // pred_check
          %p537 = pneg %p179
        $region58: #{tpu_custom_call.1} parent=39 // pred_check_branch
          %539 = sbr.rel (%p537) target = $region60
        $region59: #{tpu_custom_call.1} parent=39 // pred_region
          %s540 = smul.u32 2, %s27
          %542 = vsyncadd %s533, 0
          %s543 = smul.addr %s26, 6
          %s544 = sadd.s32 %s540, %s543
          %s545 = smul.addr %s544, 8
          %s546 = scalar_lea.hbm %s5, %s545
          %s547 = sshll.u32 %s536, 4
          %s548 = int_to_ptr.vmem [resolvable:$true] %s547
          %s549 = sshll.u32 %s546, 4
          %s550 = int_to_ptr.hbm [resolvable:$true] %s549
          %555 = dma.vmem_to_hbm [thread:$0]  %s548, 768, %s550, %s533, 128, 128, 8
        $region60: #{tpu_custom_call.1} parent=39 // pred_fallthru
          _
      $region40: #{tpu_custom_call.1} parent=5 // pred_fallthru
        _
      %p556 = scmp.le.s32.totalorder 2, %s16
      // Predicated region
      $region61: #{tpu_custom_call.1} parent=5 // pred_check
        %p557 = pneg %p556
      $region62: #{tpu_custom_call.1} parent=5 // pred_check_branch
        %559 = sbr.rel (%p557) target = $region64
      $region63: #{tpu_custom_call.1} parent=5 // pred_region
        %s560 = ssub.s32 %s16, 2
        // Predicated region
        $region65: #{tpu_custom_call.1} parent=63 // pred_check
          %p561 = pneg %p185
        $region66: #{tpu_custom_call.1} parent=63 // pred_check_branch
          %563 = sbr.rel (%p561) target = $region68
        $region67: #{tpu_custom_call.1} parent=63 // pred_region
          %s564 = sand.u32 %s170, 1
          %s565 = scalar_lea.sflag [#allocation4], %s564
          %s566 = sand.u32 %s170, 1
          %s567 = smul.addr %s566, 48
          %s568 = scalar_lea.vmem [#allocation8], %s567
          %570 = dma.done %s565, 768
        $region68: #{tpu_custom_call.1} parent=63 // pred_fallthru
          _
      $region64: #{tpu_custom_call.1} parent=5 // pred_fallthru
        _
    $region6: #{tpu_custom_call.1} parent=1 // loop_footer
      %s20 = sadd.s32 1, %s16
    $region7: #{tpu_custom_call.1} parent=1 // loop_footer_branch
      %15 = sbr.rel target = $region3
    $region8: #{tpu_custom_call.1} parent=1 // loop_exit
      _
    %571 = vsyncpa [#allocation4], 1
    %s572 = scalar_lea.sflag [#allocation4], 1
    %573 = vsyncpa %s572, 1
    %574 = vsyncpa [#allocation5], 1
    %s575 = scalar_lea.sflag [#allocation5], 1
    %576 = vsyncpa %s575, 1
    %577 = vsyncpa [#allocation7], 1

</llo_original>
